<compile_context>
chip_gen: v7x
topology: tpu7x:2x2x1
jax: 0.10.0
libtpu: 0.0.40
codegen_flags: <defaults>
</compile_context>

<pallas_src>
import functools

import jax
import jax.numpy as jnp
from jax.experimental import pallas as pl
from jax.experimental.pallas import tpu as pltpu

LANE = 128


# ----------------------------- Pallas kernel --------------------------------
def _lstm_tagger_kernel(sent_ref, xproj_ref, b_ref, whh_ref, wout_ref, bout_ref,
                        out_ref):
    """Fused embedding+input-projection, LSTM recurrence, output projection,
    log_softmax over the time axis.

    sent_ref : (B*T, 1)  int32 token ids, batch-major rows (row = b*T + t)
    xproj_ref: (Vp, Gp)  emb_table @ W_ih^T, gates packed [i|f|g|o], zero-padded
    b_ref    : (1, Gp)   combined bias (b_ih + b_hh), packed, zero-padded
    whh_ref  : (H, Gp)   hidden->gates weight (W_hh^T), packed, zero-padded
    wout_ref : (H, Kp)   hidden2tag weight (W_out^T), zero-padded
    bout_ref : (1, Kp)   hidden2tag bias, zero-padded
    out_ref  : (B, T, Kp) log-probs over the time axis (lane-dense)
    """
    B, T, Kp = out_ref.shape
    H, Gp = whh_ref.shape
    Vp = xproj_ref.shape[0]
    BT = B * T

    # ---- (1) Fused embedding lookup + input projection + bias --------------
    # one-hot(ids) @ (emb @ W_ih^T) == emb[ids] @ W_ih^T   (exact row selection)
    ids = sent_ref[...]                                              # (BT, 1)
    vocab = jax.lax.broadcasted_iota(jnp.int32, (BT, Vp), 1)         # (BT, Vp)
    onehot = jnp.where(vocab == ids, 1.0, 0.0).astype(jnp.float32)   # (BT, Vp)
    xg = (jnp.dot(onehot, xproj_ref[...], preferred_element_type=jnp.float32)
          + b_ref[...])                                              # (BT, Gp)
    xg3 = xg.reshape(B, T, Gp)                                       # layout-preserving

    whh = whh_ref[...]                                               # (H, Gp)

    # ---- (2) Fully-unrolled recurrence: one 128-lane MXU tile per step ------
    h = jnp.zeros((B, H), jnp.float32)
    c = jnp.zeros((B, H), jnp.float32)
    hs = []
    for t in range(T):
        gates = xg3[:, t, :] + jnp.dot(h, whh,
                                       preferred_element_type=jnp.float32)  # (B, Gp)
        # sigmoid via the exact tanh identity: one EUP pass over the whole vreg
        sg = 0.5 * jnp.tanh(0.5 * gates) + 0.5
        i_g = sg[:, 0 * H:1 * H]
        f_g = sg[:, 1 * H:2 * H]
        o_g = sg[:, 3 * H:4 * H]
        g_g = jnp.tanh(gates[:, 2 * H:3 * H])
        c = f_g * c + i_g * g_g
        h = o_g * jnp.tanh(c)
        hs.append(h)

    # ---- (3) Batched output projection (one matmul for all (b, t)) ----------
    hs_all = jnp.stack(hs, axis=1).reshape(BT, H)                    # (BT, H)
    tags = (jnp.dot(hs_all, wout_ref[...], preferred_element_type=jnp.float32)
            + bout_ref[...]).reshape(B, T, Kp)                       # (B, T, Kp)

    # ---- (4) log_softmax over the TIME axis (dim=1), matching the reference -
    m = jnp.max(tags, axis=1, keepdims=True)                         # (B, 1, Kp)
    lse = jnp.log(jnp.sum(jnp.exp(tags - m), axis=1, keepdims=True)) + m
    out_ref[...] = tags - lse                                        # lane-dense store


# ------------------------- one-time parameter prep ---------------------------
def prepare_params(params):
    """Hoisted weight preprocessing (runs once, outside the per-call forward)."""
    emb = params["emb"].astype(jnp.float32)            # (V, E)
    w_ih = params["w_ih"].astype(jnp.float32)          # (4H, E)  gate order i,f,g,o
    w_hh = params["w_hh"].astype(jnp.float32)          # (4H, H)
    b = (params["b_ih"] + params["b_hh"]).astype(jnp.float32)       # (4H,)
    w_out = params["w_out"].astype(jnp.float32)        # (K, H)
    b_out = params["b_out"].astype(jnp.float32)        # (K,)

    V, _ = emb.shape
    H = w_hh.shape[1]
    G = 4 * H
    K = w_out.shape[0]
    Vp = ((V + LANE - 1) // LANE) * LANE
    Gp = ((G + LANE - 1) // LANE) * LANE
    Kp = ((K + LANE - 1) // LANE) * LANE

    xproj = jnp.pad(emb @ w_ih.T, ((0, Vp - V), (0, Gp - G)))        # (Vp, Gp)
    b_p = jnp.pad(b[None, :], ((0, 0), (0, Gp - G)))                 # (1, Gp)
    whh_p = jnp.pad(w_hh.T, ((0, 0), (0, Gp - G)))                   # (H, Gp)
    wout_p = jnp.pad(w_out.T, ((0, 0), (0, Kp - K)))                 # (H, Kp)
    bout_p = jnp.pad(b_out[None, :], ((0, 0), (0, Kp - K)))          # (1, Kp)

    return {"xproj": xproj, "b": b_p, "whh": whh_p,
            "wout": wout_p, "bout": bout_p}


# --------------------------------- wrapper ------------------------------------
@functools.partial(jax.jit, static_argnames=("batch_size", "num_tags"))
def lstm_tagger_forward(sentence, prep, *, batch_size, num_tags):
    """Mirrors LSTMTagger.forward(sentence) -> (B, T, K) log-probs."""
    B = batch_size
    N = sentence.shape[0]
    T = N // B
    Kp = prep["wout"].shape[1]

    sent2d = sentence.astype(jnp.int32).reshape(N, 1)                # (B*T, 1)

    out_padded = pl.pallas_call(
        _lstm_tagger_kernel,
        out_shape=jax.ShapeDtypeStruct((B, T, Kp), jnp.float32),
        in_specs=[pl.BlockSpec(memory_space=pltpu.MemorySpace.VMEM)] * 6,
        out_specs=pl.BlockSpec(memory_space=pltpu.MemorySpace.VMEM),
    )(sent2d, prep["xproj"], prep["b"], prep["whh"], prep["wout"], prep["bout"])

    return out_padded[:, :, :num_tags]                               # (B, T, K)


# ------------------------- pure-JAX reference ---------------------------------
def lstm_tagger_reference(sentence, params, *, batch_size):
    emb = jnp.take(params["emb"], sentence, axis=0)
    E = params["emb"].shape[1]
    H = params["w_hh"].shape[1]
    B = batch_size
    T = sentence.shape[0] // B
    x = emb.reshape(B, T, E)

    w_ih, w_hh = params["w_ih"], params["w_hh"]
    b = params["b_ih"] + params["b_hh"]
    h = jnp.zeros((B, H), jnp.float32)
    c = jnp.zeros((B, H), jnp.float32)
    outs = []
    for t in range(T):
        gates = x[:, t] @ w_ih.T + h @ w_hh.T + b
        i_g = jax.nn.sigmoid(gates[:, 0 * H:1 * H])
        f_g = jax.nn.sigmoid(gates[:, 1 * H:2 * H])
        g_g = jnp.tanh(gates[:, 2 * H:3 * H])
        o_g = jax.nn.sigmoid(gates[:, 3 * H:4 * H])
        c = f_g * c + i_g * g_g
        h = o_g * jnp.tanh(c)
        outs.append(h @ params["w_out"].T + params["b_out"])
    tag_space = jnp.stack(outs, axis=1)                              # (B, T, K)
    return jax.nn.log_softmax(tag_space, axis=1)                     # dim=1 == time


# --------------------------------- main ---------------------------------------
if __name__ == "__main__":
    EMBEDDING_DIM = 32
    HIDDEN_DIM = 32
    VOCAB_SIZE = 50
    TAGSET_SIZE = 8
    BATCH_SIZE = 2
    SEQ_PER_BATCH = 8
    SENT_LEN = BATCH_SIZE * SEQ_PER_BATCH          # len(sentence) == 16

    key = jax.random.PRNGKey(0)
    keys = jax.random.split(key, 8)
    scale = 0.1
    params = {
        "emb":   scale * jax.random.normal(keys[0], (VOCAB_SIZE, EMBEDDING_DIM), jnp.float32),
        "w_ih":  scale * jax.random.normal(keys[1], (4 * HIDDEN_DIM, EMBEDDING_DIM), jnp.float32),
        "w_hh":  scale * jax.random.normal(keys[2], (4 * HIDDEN_DIM, HIDDEN_DIM), jnp.float32),
        "b_ih":  scale * jax.random.normal(keys[3], (4 * HIDDEN_DIM,), jnp.float32),
        "b_hh":  scale * jax.random.normal(keys[4], (4 * HIDDEN_DIM,), jnp.float32),
        "w_out": scale * jax.random.normal(keys[5], (TAGSET_SIZE, HIDDEN_DIM), jnp.float32),
        "b_out": scale * jax.random.normal(keys[6], (TAGSET_SIZE,), jnp.float32),
    }
    sentence = jax.random.randint(keys[7], (SENT_LEN,), 0, VOCAB_SIZE, jnp.int32)

    prep = prepare_params(params)                  # one-time weight preprocessing
    prep = jax.tree_util.tree_map(jax.block_until_ready, prep)

    out = lstm_tagger_forward(sentence, prep,
                              batch_size=BATCH_SIZE, num_tags=TAGSET_SIZE)
    out = jax.block_until_ready(out)

    ref = lstm_tagger_reference(sentence, params, batch_size=BATCH_SIZE)
    assert out.shape == (BATCH_SIZE, SEQ_PER_BATCH, TAGSET_SIZE)
    assert jnp.allclose(out, ref, atol=1e-5, rtol=1e-5), "mismatch vs reference"

    print("KERNEL_OK")
</pallas_src>

<mosaic_0001>
module attributes {stable_mosaic.version = 11 : i64} {
  func.func @_lstm_tagger_kernel(%arg0: memref<16x1xi32, #tpu.memory_space<vmem>>, %arg1: memref<128x128xf32, #tpu.memory_space<vmem>>, %arg2: memref<1x128xf32, #tpu.memory_space<vmem>>, %arg3: memref<32x128xf32, #tpu.memory_space<vmem>>, %arg4: memref<32x128xf32, #tpu.memory_space<vmem>>, %arg5: memref<1x128xf32, #tpu.memory_space<vmem>>, %arg6: memref<2x8x128xf32, #tpu.memory_space<vmem>>) attributes {dimension_semantics = [], scalar_prefetch = 0 : i64, scratch_operands = 0 : i64, tpu.core_type = #tpu.core_type<tc>} {
    %c0 = arith.constant 0 : index
    %c0_0 = arith.constant 0 : index
    %0 = vector.load %arg0[%c0, %c0_0] : memref<16x1xi32, #tpu.memory_space<vmem>>, vector<16x1xi32>
    %1 = tpu.iota {dimensions = array<i32: 1>} : vector<16x128xi32>
    %2 = vector.broadcast %0 : vector<16x1xi32> to vector<16x128xi32>
    %3 = arith.cmpi eq, %1, %2 : vector<16x128xi32>
    %cst = arith.constant 1.000000e+00 : f32
    %cst_1 = arith.constant 0.000000e+00 : f32
    %4 = vector.broadcast %cst : f32 to vector<16x128xf32>
    %5 = vector.broadcast %cst_1 : f32 to vector<16x128xf32>
    %6 = arith.select %3, %4, %5 : vector<16x128xi1>, vector<16x128xf32>
    %c0_2 = arith.constant 0 : index
    %c0_3 = arith.constant 0 : index
    %7 = vector.load %arg1[%c0_2, %c0_3] : memref<128x128xf32, #tpu.memory_space<vmem>>, vector<128x128xf32>
    %cst_4 = arith.constant dense<0.000000e+00> : vector<16x128xf32>
    %8 = tpu.matmul %6, %7, %cst_4 {dimension_numbers = #tpu.dot_dimension_numbers<[1], [0], [0], [1], [0, 0, 1, 1], [], []>} : vector<16x128xf32>, vector<128x128xf32>, vector<16x128xf32> -> vector<16x128xf32>
    %c0_5 = arith.constant 0 : index
    %c0_6 = arith.constant 0 : index
    %9 = vector.load %arg2[%c0_5, %c0_6] : memref<1x128xf32, #tpu.memory_space<vmem>>, vector<1x128xf32>
    %10 = vector.broadcast %9 : vector<1x128xf32> to vector<16x128xf32>
    %11 = arith.addf %8, %10 : vector<16x128xf32>
    %12 = vector.shape_cast %11 : vector<16x128xf32> to vector<2x8x128xf32>
    %c0_7 = arith.constant 0 : index
    %c0_8 = arith.constant 0 : index
    %13 = vector.load %arg3[%c0_7, %c0_8] : memref<32x128xf32, #tpu.memory_space<vmem>>, vector<32x128xf32>
    %cst_9 = arith.constant 0.000000e+00 : f32
    %14 = vector.broadcast %cst_9 : f32 to vector<2x32xf32>
    %cst_10 = arith.constant 0.000000e+00 : f32
    %15 = vector.broadcast %cst_10 : f32 to vector<2x32xf32>
    %16 = vector.extract_strided_slice %12 {offsets = [0, 0, 0], sizes = [2, 1, 128], strides = [1, 1, 1]} : vector<2x8x128xf32> to vector<2x1x128xf32>
    %17 = vector.shape_cast %16 : vector<2x1x128xf32> to vector<2x128xf32>
    %cst_11 = arith.constant dense<0.000000e+00> : vector<2x128xf32>
    %18 = tpu.matmul %14, %13, %cst_11 {dimension_numbers = #tpu.dot_dimension_numbers<[1], [0], [0], [1], [0, 0, 1, 1], [], []>} : vector<2x32xf32>, vector<32x128xf32>, vector<2x128xf32> -> vector<2x128xf32>
    %19 = arith.addf %17, %18 : vector<2x128xf32>
    %cst_12 = arith.constant 5.000000e-01 : f32
    %20 = vector.broadcast %cst_12 : f32 to vector<2x128xf32>
    %21 = arith.mulf %20, %19 : vector<2x128xf32>
    %22 = math.tanh %21 : vector<2x128xf32>
    %cst_13 = arith.constant 5.000000e-01 : f32
    %23 = vector.broadcast %cst_13 : f32 to vector<2x128xf32>
    %24 = arith.mulf %23, %22 : vector<2x128xf32>
    %cst_14 = arith.constant 5.000000e-01 : f32
    %25 = vector.broadcast %cst_14 : f32 to vector<2x128xf32>
    %26 = arith.addf %24, %25 : vector<2x128xf32>
    %27 = vector.extract_strided_slice %26 {offsets = [0, 0], sizes = [2, 32], strides = [1, 1]} : vector<2x128xf32> to vector<2x32xf32>
    %28 = vector.extract_strided_slice %26 {offsets = [0, 32], sizes = [2, 32], strides = [1, 1]} : vector<2x128xf32> to vector<2x32xf32>
    %29 = vector.extract_strided_slice %26 {offsets = [0, 96], sizes = [2, 32], strides = [1, 1]} : vector<2x128xf32> to vector<2x32xf32>
    %30 = vector.extract_strided_slice %19 {offsets = [0, 64], sizes = [2, 32], strides = [1, 1]} : vector<2x128xf32> to vector<2x32xf32>
    %31 = math.tanh %30 : vector<2x32xf32>
    %32 = arith.mulf %28, %15 : vector<2x32xf32>
    %33 = arith.mulf %27, %31 : vector<2x32xf32>
    %34 = arith.addf %32, %33 : vector<2x32xf32>
    %35 = math.tanh %34 : vector<2x32xf32>
    %36 = arith.mulf %29, %35 : vector<2x32xf32>
    %37 = vector.extract_strided_slice %12 {offsets = [0, 1, 0], sizes = [2, 1, 128], strides = [1, 1, 1]} : vector<2x8x128xf32> to vector<2x1x128xf32>
    %38 = vector.shape_cast %37 : vector<2x1x128xf32> to vector<2x128xf32>
    %cst_15 = arith.constant dense<0.000000e+00> : vector<2x128xf32>
    %39 = tpu.matmul %36, %13, %cst_15 {dimension_numbers = #tpu.dot_dimension_numbers<[1], [0], [0], [1], [0, 0, 1, 1], [], []>} : vector<2x32xf32>, vector<32x128xf32>, vector<2x128xf32> -> vector<2x128xf32>
    %40 = arith.addf %38, %39 : vector<2x128xf32>
    %cst_16 = arith.constant 5.000000e-01 : f32
    %41 = vector.broadcast %cst_16 : f32 to vector<2x128xf32>
    %42 = arith.mulf %41, %40 : vector<2x128xf32>
    %43 = math.tanh %42 : vector<2x128xf32>
    %cst_17 = arith.constant 5.000000e-01 : f32
    %44 = vector.broadcast %cst_17 : f32 to vector<2x128xf32>
    %45 = arith.mulf %44, %43 : vector<2x128xf32>
    %cst_18 = arith.constant 5.000000e-01 : f32
    %46 = vector.broadcast %cst_18 : f32 to vector<2x128xf32>
    %47 = arith.addf %45, %46 : vector<2x128xf32>
    %48 = vector.extract_strided_slice %47 {offsets = [0, 0], sizes = [2, 32], strides = [1, 1]} : vector<2x128xf32> to vector<2x32xf32>
    %49 = vector.extract_strided_slice %47 {offsets = [0, 32], sizes = [2, 32], strides = [1, 1]} : vector<2x128xf32> to vector<2x32xf32>
    %50 = vector.extract_strided_slice %47 {offsets = [0, 96], sizes = [2, 32], strides = [1, 1]} : vector<2x128xf32> to vector<2x32xf32>
    %51 = vector.extract_strided_slice %40 {offsets = [0, 64], sizes = [2, 32], strides = [1, 1]} : vector<2x128xf32> to vector<2x32xf32>
    %52 = math.tanh %51 : vector<2x32xf32>
    %53 = arith.mulf %49, %34 : vector<2x32xf32>
    %54 = arith.mulf %48, %52 : vector<2x32xf32>
    %55 = arith.addf %53, %54 : vector<2x32xf32>
    %56 = math.tanh %55 : vector<2x32xf32>
    %57 = arith.mulf %50, %56 : vector<2x32xf32>
    %58 = vector.extract_strided_slice %12 {offsets = [0, 2, 0], sizes = [2, 1, 128], strides = [1, 1, 1]} : vector<2x8x128xf32> to vector<2x1x128xf32>
    %59 = vector.shape_cast %58 : vector<2x1x128xf32> to vector<2x128xf32>
    %cst_19 = arith.constant dense<0.000000e+00> : vector<2x128xf32>
    %60 = tpu.matmul %57, %13, %cst_19 {dimension_numbers = #tpu.dot_dimension_numbers<[1], [0], [0], [1], [0, 0, 1, 1], [], []>} : vector<2x32xf32>, vector<32x128xf32>, vector<2x128xf32> -> vector<2x128xf32>
    %61 = arith.addf %59, %60 : vector<2x128xf32>
    %cst_20 = arith.constant 5.000000e-01 : f32
    %62 = vector.broadcast %cst_20 : f32 to vector<2x128xf32>
    %63 = arith.mulf %62, %61 : vector<2x128xf32>
    %64 = math.tanh %63 : vector<2x128xf32>
    %cst_21 = arith.constant 5.000000e-01 : f32
    %65 = vector.broadcast %cst_21 : f32 to vector<2x128xf32>
    %66 = arith.mulf %65, %64 : vector<2x128xf32>
    %cst_22 = arith.constant 5.000000e-01 : f32
    %67 = vector.broadcast %cst_22 : f32 to vector<2x128xf32>
    %68 = arith.addf %66, %67 : vector<2x128xf32>
    %69 = vector.extract_strided_slice %68 {offsets = [0, 0], sizes = [2, 32], strides = [1, 1]} : vector<2x128xf32> to vector<2x32xf32>
    %70 = vector.extract_strided_slice %68 {offsets = [0, 32], sizes = [2, 32], strides = [1, 1]} : vector<2x128xf32> to vector<2x32xf32>
    %71 = vector.extract_strided_slice %68 {offsets = [0, 96], sizes = [2, 32], strides = [1, 1]} : vector<2x128xf32> to vector<2x32xf32>
    %72 = vector.extract_strided_slice %61 {offsets = [0, 64], sizes = [2, 32], strides = [1, 1]} : vector<2x128xf32> to vector<2x32xf32>
    %73 = math.tanh %72 : vector<2x32xf32>
    %74 = arith.mulf %70, %55 : vector<2x32xf32>
    %75 = arith.mulf %69, %73 : vector<2x32xf32>
    %76 = arith.addf %74, %75 : vector<2x32xf32>
    %77 = math.tanh %76 : vector<2x32xf32>
    %78 = arith.mulf %71, %77 : vector<2x32xf32>
    %79 = vector.extract_strided_slice %12 {offsets = [0, 3, 0], sizes = [2, 1, 128], strides = [1, 1, 1]} : vector<2x8x128xf32> to vector<2x1x128xf32>
    %80 = vector.shape_cast %79 : vector<2x1x128xf32> to vector<2x128xf32>
    %cst_23 = arith.constant dense<0.000000e+00> : vector<2x128xf32>
    %81 = tpu.matmul %78, %13, %cst_23 {dimension_numbers = #tpu.dot_dimension_numbers<[1], [0], [0], [1], [0, 0, 1, 1], [], []>} : vector<2x32xf32>, vector<32x128xf32>, vector<2x128xf32> -> vector<2x128xf32>
    %82 = arith.addf %80, %81 : vector<2x128xf32>
    %cst_24 = arith.constant 5.000000e-01 : f32
    %83 = vector.broadcast %cst_24 : f32 to vector<2x128xf32>
    %84 = arith.mulf %83, %82 : vector<2x128xf32>
    %85 = math.tanh %84 : vector<2x128xf32>
    %cst_25 = arith.constant 5.000000e-01 : f32
    %86 = vector.broadcast %cst_25 : f32 to vector<2x128xf32>
    %87 = arith.mulf %86, %85 : vector<2x128xf32>
    %cst_26 = arith.constant 5.000000e-01 : f32
    %88 = vector.broadcast %cst_26 : f32 to vector<2x128xf32>
    %89 = arith.addf %87, %88 : vector<2x128xf32>
    %90 = vector.extract_strided_slice %89 {offsets = [0, 0], sizes = [2, 32], strides = [1, 1]} : vector<2x128xf32> to vector<2x32xf32>
    %91 = vector.extract_strided_slice %89 {offsets = [0, 32], sizes = [2, 32], strides = [1, 1]} : vector<2x128xf32> to vector<2x32xf32>
    %92 = vector.extract_strided_slice %89 {offsets = [0, 96], sizes = [2, 32], strides = [1, 1]} : vector<2x128xf32> to vector<2x32xf32>
    %93 = vector.extract_strided_slice %82 {offsets = [0, 64], sizes = [2, 32], strides = [1, 1]} : vector<2x128xf32> to vector<2x32xf32>
    %94 = math.tanh %93 : vector<2x32xf32>
    %95 = arith.mulf %91, %76 : vector<2x32xf32>
    %96 = arith.mulf %90, %94 : vector<2x32xf32>
    %97 = arith.addf %95, %96 : vector<2x32xf32>
    %98 = math.tanh %97 : vector<2x32xf32>
    %99 = arith.mulf %92, %98 : vector<2x32xf32>
    %100 = vector.extract_strided_slice %12 {offsets = [0, 4, 0], sizes = [2, 1, 128], strides = [1, 1, 1]} : vector<2x8x128xf32> to vector<2x1x128xf32>
    %101 = vector.shape_cast %100 : vector<2x1x128xf32> to vector<2x128xf32>
    %cst_27 = arith.constant dense<0.000000e+00> : vector<2x128xf32>
    %102 = tpu.matmul %99, %13, %cst_27 {dimension_numbers = #tpu.dot_dimension_numbers<[1], [0], [0], [1], [0, 0, 1, 1], [], []>} : vector<2x32xf32>, vector<32x128xf32>, vector<2x128xf32> -> vector<2x128xf32>
    %103 = arith.addf %101, %102 : vector<2x128xf32>
    %cst_28 = arith.constant 5.000000e-01 : f32
    %104 = vector.broadcast %cst_28 : f32 to vector<2x128xf32>
    %105 = arith.mulf %104, %103 : vector<2x128xf32>
    %106 = math.tanh %105 : vector<2x128xf32>
    %cst_29 = arith.constant 5.000000e-01 : f32
    %107 = vector.broadcast %cst_29 : f32 to vector<2x128xf32>
    %108 = arith.mulf %107, %106 : vector<2x128xf32>
    %cst_30 = arith.constant 5.000000e-01 : f32
    %109 = vector.broadcast %cst_30 : f32 to vector<2x128xf32>
    %110 = arith.addf %108, %109 : vector<2x128xf32>
    %111 = vector.extract_strided_slice %110 {offsets = [0, 0], sizes = [2, 32], strides = [1, 1]} : vector<2x128xf32> to vector<2x32xf32>
    %112 = vector.extract_strided_slice %110 {offsets = [0, 32], sizes = [2, 32], strides = [1, 1]} : vector<2x128xf32> to vector<2x32xf32>
    %113 = vector.extract_strided_slice %110 {offsets = [0, 96], sizes = [2, 32], strides = [1, 1]} : vector<2x128xf32> to vector<2x32xf32>
    %114 = vector.extract_strided_slice %103 {offsets = [0, 64], sizes = [2, 32], strides = [1, 1]} : vector<2x128xf32> to vector<2x32xf32>
    %115 = math.tanh %114 : vector<2x32xf32>
    %116 = arith.mulf %112, %97 : vector<2x32xf32>
    %117 = arith.mulf %111, %115 : vector<2x32xf32>
    %118 = arith.addf %116, %117 : vector<2x32xf32>
    %119 = math.tanh %118 : vector<2x32xf32>
    %120 = arith.mulf %113, %119 : vector<2x32xf32>
    %121 = vector.extract_strided_slice %12 {offsets = [0, 5, 0], sizes = [2, 1, 128], strides = [1, 1, 1]} : vector<2x8x128xf32> to vector<2x1x128xf32>
    %122 = vector.shape_cast %121 : vector<2x1x128xf32> to vector<2x128xf32>
    %cst_31 = arith.constant dense<0.000000e+00> : vector<2x128xf32>
    %123 = tpu.matmul %120, %13, %cst_31 {dimension_numbers = #tpu.dot_dimension_numbers<[1], [0], [0], [1], [0, 0, 1, 1], [], []>} : vector<2x32xf32>, vector<32x128xf32>, vector<2x128xf32> -> vector<2x128xf32>
    %124 = arith.addf %122, %123 : vector<2x128xf32>
    %cst_32 = arith.constant 5.000000e-01 : f32
    %125 = vector.broadcast %cst_32 : f32 to vector<2x128xf32>
    %126 = arith.mulf %125, %124 : vector<2x128xf32>
    %127 = math.tanh %126 : vector<2x128xf32>
    %cst_33 = arith.constant 5.000000e-01 : f32
    %128 = vector.broadcast %cst_33 : f32 to vector<2x128xf32>
    %129 = arith.mulf %128, %127 : vector<2x128xf32>
    %cst_34 = arith.constant 5.000000e-01 : f32
    %130 = vector.broadcast %cst_34 : f32 to vector<2x128xf32>
    %131 = arith.addf %129, %130 : vector<2x128xf32>
    %132 = vector.extract_strided_slice %131 {offsets = [0, 0], sizes = [2, 32], strides = [1, 1]} : vector<2x128xf32> to vector<2x32xf32>
    %133 = vector.extract_strided_slice %131 {offsets = [0, 32], sizes = [2, 32], strides = [1, 1]} : vector<2x128xf32> to vector<2x32xf32>
    %134 = vector.extract_strided_slice %131 {offsets = [0, 96], sizes = [2, 32], strides = [1, 1]} : vector<2x128xf32> to vector<2x32xf32>
    %135 = vector.extract_strided_slice %124 {offsets = [0, 64], sizes = [2, 32], strides = [1, 1]} : vector<2x128xf32> to vector<2x32xf32>
    %136 = math.tanh %135 : vector<2x32xf32>
    %137 = arith.mulf %133, %118 : vector<2x32xf32>
    %138 = arith.mulf %132, %136 : vector<2x32xf32>
    %139 = arith.addf %137, %138 : vector<2x32xf32>
    %140 = math.tanh %139 : vector<2x32xf32>
    %141 = arith.mulf %134, %140 : vector<2x32xf32>
    %142 = vector.extract_strided_slice %12 {offsets = [0, 6, 0], sizes = [2, 1, 128], strides = [1, 1, 1]} : vector<2x8x128xf32> to vector<2x1x128xf32>
    %143 = vector.shape_cast %142 : vector<2x1x128xf32> to vector<2x128xf32>
    %cst_35 = arith.constant dense<0.000000e+00> : vector<2x128xf32>
    %144 = tpu.matmul %141, %13, %cst_35 {dimension_numbers = #tpu.dot_dimension_numbers<[1], [0], [0], [1], [0, 0, 1, 1], [], []>} : vector<2x32xf32>, vector<32x128xf32>, vector<2x128xf32> -> vector<2x128xf32>
    %145 = arith.addf %143, %144 : vector<2x128xf32>
    %cst_36 = arith.constant 5.000000e-01 : f32
    %146 = vector.broadcast %cst_36 : f32 to vector<2x128xf32>
    %147 = arith.mulf %146, %145 : vector<2x128xf32>
    %148 = math.tanh %147 : vector<2x128xf32>
    %cst_37 = arith.constant 5.000000e-01 : f32
    %149 = vector.broadcast %cst_37 : f32 to vector<2x128xf32>
    %150 = arith.mulf %149, %148 : vector<2x128xf32>
    %cst_38 = arith.constant 5.000000e-01 : f32
    %151 = vector.broadcast %cst_38 : f32 to vector<2x128xf32>
    %152 = arith.addf %150, %151 : vector<2x128xf32>
    %153 = vector.extract_strided_slice %152 {offsets = [0, 0], sizes = [2, 32], strides = [1, 1]} : vector<2x128xf32> to vector<2x32xf32>
    %154 = vector.extract_strided_slice %152 {offsets = [0, 32], sizes = [2, 32], strides = [1, 1]} : vector<2x128xf32> to vector<2x32xf32>
    %155 = vector.extract_strided_slice %152 {offsets = [0, 96], sizes = [2, 32], strides = [1, 1]} : vector<2x128xf32> to vector<2x32xf32>
    %156 = vector.extract_strided_slice %145 {offsets = [0, 64], sizes = [2, 32], strides = [1, 1]} : vector<2x128xf32> to vector<2x32xf32>
    %157 = math.tanh %156 : vector<2x32xf32>
    %158 = arith.mulf %154, %139 : vector<2x32xf32>
    %159 = arith.mulf %153, %157 : vector<2x32xf32>
    %160 = arith.addf %158, %159 : vector<2x32xf32>
    %161 = math.tanh %160 : vector<2x32xf32>
    %162 = arith.mulf %155, %161 : vector<2x32xf32>
    %163 = vector.extract_strided_slice %12 {offsets = [0, 7, 0], sizes = [2, 1, 128], strides = [1, 1, 1]} : vector<2x8x128xf32> to vector<2x1x128xf32>
    %164 = vector.shape_cast %163 : vector<2x1x128xf32> to vector<2x128xf32>
    %cst_39 = arith.constant dense<0.000000e+00> : vector<2x128xf32>
    %165 = tpu.matmul %162, %13, %cst_39 {dimension_numbers = #tpu.dot_dimension_numbers<[1], [0], [0], [1], [0, 0, 1, 1], [], []>} : vector<2x32xf32>, vector<32x128xf32>, vector<2x128xf32> -> vector<2x128xf32>
    %166 = arith.addf %164, %165 : vector<2x128xf32>
    %cst_40 = arith.constant 5.000000e-01 : f32
    %167 = vector.broadcast %cst_40 : f32 to vector<2x128xf32>
    %168 = arith.mulf %167, %166 : vector<2x128xf32>
    %169 = math.tanh %168 : vector<2x128xf32>
    %cst_41 = arith.constant 5.000000e-01 : f32
    %170 = vector.broadcast %cst_41 : f32 to vector<2x128xf32>
    %171 = arith.mulf %170, %169 : vector<2x128xf32>
    %cst_42 = arith.constant 5.000000e-01 : f32
    %172 = vector.broadcast %cst_42 : f32 to vector<2x128xf32>
    %173 = arith.addf %171, %172 : vector<2x128xf32>
    %174 = vector.extract_strided_slice %173 {offsets = [0, 0], sizes = [2, 32], strides = [1, 1]} : vector<2x128xf32> to vector<2x32xf32>
    %175 = vector.extract_strided_slice %173 {offsets = [0, 32], sizes = [2, 32], strides = [1, 1]} : vector<2x128xf32> to vector<2x32xf32>
    %176 = vector.extract_strided_slice %173 {offsets = [0, 96], sizes = [2, 32], strides = [1, 1]} : vector<2x128xf32> to vector<2x32xf32>
    %177 = vector.extract_strided_slice %166 {offsets = [0, 64], sizes = [2, 32], strides = [1, 1]} : vector<2x128xf32> to vector<2x32xf32>
    %178 = math.tanh %177 : vector<2x32xf32>
    %179 = arith.mulf %175, %160 : vector<2x32xf32>
    %180 = arith.mulf %174, %178 : vector<2x32xf32>
    %181 = arith.addf %179, %180 : vector<2x32xf32>
    %182 = math.tanh %181 : vector<2x32xf32>
    %183 = arith.mulf %176, %182 : vector<2x32xf32>
    %184 = vector.shape_cast %36 : vector<2x32xf32> to vector<2x1x32xf32>
    %185 = vector.shape_cast %57 : vector<2x32xf32> to vector<2x1x32xf32>
    %186 = vector.shape_cast %78 : vector<2x32xf32> to vector<2x1x32xf32>
    %187 = vector.shape_cast %99 : vector<2x32xf32> to vector<2x1x32xf32>
    %188 = vector.shape_cast %120 : vector<2x32xf32> to vector<2x1x32xf32>
    %189 = vector.shape_cast %141 : vector<2x32xf32> to vector<2x1x32xf32>
    %190 = vector.shape_cast %162 : vector<2x32xf32> to vector<2x1x32xf32>
    %191 = vector.shape_cast %183 : vector<2x32xf32> to vector<2x1x32xf32>
    %192 = tpu.concatenate %184, %185, %186, %187, %188, %189, %190, %191 in 1 : vector<2x1x32xf32>, vector<2x1x32xf32>, vector<2x1x32xf32>, vector<2x1x32xf32>, vector<2x1x32xf32>, vector<2x1x32xf32>, vector<2x1x32xf32>, vector<2x1x32xf32> -> vector<2x8x32xf32>
    %193 = vector.shape_cast %192 : vector<2x8x32xf32> to vector<16x32xf32>
    %c0_43 = arith.constant 0 : index
    %c0_44 = arith.constant 0 : index
    %194 = vector.load %arg4[%c0_43, %c0_44] : memref<32x128xf32, #tpu.memory_space<vmem>>, vector<32x128xf32>
    %cst_45 = arith.constant dense<0.000000e+00> : vector<16x128xf32>
    %195 = tpu.matmul %193, %194, %cst_45 {dimension_numbers = #tpu.dot_dimension_numbers<[1], [0], [0], [1], [0, 0, 1, 1], [], []>} : vector<16x32xf32>, vector<32x128xf32>, vector<16x128xf32> -> vector<16x128xf32>
    %c0_46 = arith.constant 0 : index
    %c0_47 = arith.constant 0 : index
    %196 = vector.load %arg5[%c0_46, %c0_47] : memref<1x128xf32, #tpu.memory_space<vmem>>, vector<1x128xf32>
    %197 = vector.broadcast %196 : vector<1x128xf32> to vector<16x128xf32>
    %198 = arith.addf %195, %197 : vector<16x128xf32>
    %199 = vector.shape_cast %198 : vector<16x128xf32> to vector<2x8x128xf32>
    %cst_48 = arith.constant dense<0xFF800000> : vector<2x128xf32>
    %200 = vector.multi_reduction <maximumf>, %199, %cst_48 [1] : vector<2x8x128xf32> to vector<2x128xf32>
    %201 = vector.shape_cast %200 : vector<2x128xf32> to vector<2x1x128xf32>
    %202 = vector.broadcast %201 : vector<2x1x128xf32> to vector<2x8x128xf32>
    %203 = arith.subf %199, %202 : vector<2x8x128xf32>
    %204 = math.exp %203 : vector<2x8x128xf32>
    %cst_49 = arith.constant dense<0.000000e+00> : vector<2x128xf32>
    %205 = vector.multi_reduction <add>, %204, %cst_49 [1] : vector<2x8x128xf32> to vector<2x128xf32>
    %206 = vector.shape_cast %205 : vector<2x128xf32> to vector<2x1x128xf32>
    %207 = math.log %206 : vector<2x1x128xf32>
    %208 = arith.addf %207, %201 : vector<2x1x128xf32>
    %209 = vector.broadcast %208 : vector<2x1x128xf32> to vector<2x8x128xf32>
    %210 = arith.subf %199, %209 : vector<2x8x128xf32>
    %c0_50 = arith.constant 0 : index
    %c0_51 = arith.constant 0 : index
    %c0_52 = arith.constant 0 : index
    %211 = vector.load %arg6[%c0_50, %c0_51, %c0_52] : memref<2x8x128xf32, #tpu.memory_space<vmem>>, vector<2x8x128xf32>
    tpu.vector_store %arg6[%c0_50, %c0_51, %c0_52], %210 {strides = array<i32>} : memref<2x8x128xf32, #tpu.memory_space<vmem>>, vector<2x8x128xf32>,
    return
  }
}

</mosaic_0001>

<llo_original>
// kernel: lstm_tagger_forward.1
$region0: #{lstm_tagger_forward.1}
  #allocation0 [shape = 'u32[]', space=smem, size = 0x4, offset = 0x4, fixed_abs, tag = 'smem constant byte address 0x4 - core index']
  #allocation1 [shape = 'u32[144,128]{1,0:T(1,128)}', space=vmem, size = 0x12000, scoped, tag = 'internal scratch']
  %s0 = inlined_call_operand.vmem [shape: s32[16,1], index: 0, kind: input, shape index: {}]
  %s1 = inlined_call_operand.hbm [shape: f32[128,128], index: 1, kind: input, shape index: {}]
  %s2 = inlined_call_operand.hbm [shape: f32[1,128], index: 2, kind: input, shape index: {}]
  %s3 = inlined_call_operand.vmem [shape: f32[32,128], index: 3, kind: input, shape index: {}]
  %s4 = inlined_call_operand.hbm [shape: f32[32,128], index: 4, kind: input, shape index: {}]
  %s5 = inlined_call_operand.hbm [shape: f32[1,128], index: 5, kind: input, shape index: {}]
  %s6 = inlined_call_operand.hbm [shape: f32[2,8,128], index: 6, kind: output, shape index: {}]
  %s7 = sld [smem:[#allocation0]]
  $region50: #{lstm_tagger_forward.1} parent=0
    _
  %s9 = ssub.s32 1, %s7
  %s10 = scalar_select 0, %s9, %s7
  $region1: #{lstm_tagger_forward.1} parent=0
    #allocation2 [shape = 'u8[65536]{0}', space=vmem, size = 0x10000, scoped, tag = 'input window, operand 1, single buffered']
    #allocation3 [shape = 's32[1]{0}', space=sflag, size = 0x4, scoped, tag = 'scoped memory for lstm_tagger_forward.1']
    #allocation4 [shape = 's32[1]{0}', space=sflag, size = 0x4, scoped, tag = 'scoped memory for lstm_tagger_forward.1']
    #allocation5 [shape = 'u8[512]{0}', space=vmem, size = 0x400, scoped, tag = 'input window, operand 2, single buffered']
    #allocation6 [shape = 's32[1]{0}', space=sflag, size = 0x4, scoped, tag = 'scoped memory for lstm_tagger_forward.1']
    #allocation7 [shape = 'u8[16384]{0}', space=vmem, size = 0x4000, scoped, tag = 'input window, operand 4, single buffered']
    #allocation8 [shape = 'u8[512]{0}', space=vmem, size = 0x400, scoped, tag = 'input window, operand 5, single buffered']
    #allocation9 [shape = 's32[1]{0}', space=sflag, size = 0x4, scoped, tag = 'scoped memory for lstm_tagger_forward.1']
    #allocation10 [shape = 'u8[8192]{0}', space=vmem, size = 0x2000, scoped, tag = 'output window, operand 0, single buffered']
    %11 = vsyncpa [#allocation3], 0
    %12 = vsyncpa [#allocation6], 0
    %13 = vsyncpa [#allocation9], 0
    %14 = vsyncpa [#allocation4], 0
    // Predicated region
    $region2: #{lstm_tagger_forward.1} parent=1 // pred_check
      _
    $region3: #{lstm_tagger_forward.1} parent=1 // pred_check_branch
      %16 = sbr.rel (0) target = $region5
    $region4: #{lstm_tagger_forward.1} parent=1 // pred_region
      _
    $region5: #{lstm_tagger_forward.1} parent=1 // pred_fallthru
      _
    // Predicated region
    $region6: #{lstm_tagger_forward.1} parent=1 // pred_check
      _
    $region7: #{lstm_tagger_forward.1} parent=1 // pred_check_branch
      %18 = sbr.rel (0) target = $region9
    $region8: #{lstm_tagger_forward.1} parent=1 // pred_region
      %s20 = ssub.s32 2048, 2048
      %21 = vsyncadd [#allocation3], %s20
      %s22 = sshll.u32 [#allocation2], 4
      %s23 = int_to_ptr.vmem [resolvable:$true] %s22
      %28 = dma.hbm_to_vmem [thread:$0]  %s1, 2048, %s23, [#allocation3], 128, 128, 8
    $region9: #{lstm_tagger_forward.1} parent=1 // pred_fallthru
      _
    // Predicated region
    $region10: #{lstm_tagger_forward.1} parent=1 // pred_check
      _
    $region11: #{lstm_tagger_forward.1} parent=1 // pred_check_branch
      %30 = sbr.rel (0) target = $region13
    $region12: #{lstm_tagger_forward.1} parent=1 // pred_region
      %s32 = ssub.s32 16, 16
      %33 = vsyncadd [#allocation6], %s32
      %s35 = sshll.u32 [#allocation5], 4
      %s36 = int_to_ptr.vmem [resolvable:$true] %s35
      %38 = dma.hbm_to_vmem [thread:$0]  %s2, 16, %s36, [#allocation6]
    $region13: #{lstm_tagger_forward.1} parent=1 // pred_fallthru
      _
    // Predicated region
    $region14: #{lstm_tagger_forward.1} parent=1 // pred_check
      _
    $region15: #{lstm_tagger_forward.1} parent=1 // pred_check_branch
      %40 = sbr.rel (0) target = $region17
    $region16: #{lstm_tagger_forward.1} parent=1 // pred_region
      _
    $region17: #{lstm_tagger_forward.1} parent=1 // pred_fallthru
      _
    // Predicated region
    $region18: #{lstm_tagger_forward.1} parent=1 // pred_check
      _
    $region19: #{lstm_tagger_forward.1} parent=1 // pred_check_branch
      %42 = sbr.rel (0) target = $region21
    $region20: #{lstm_tagger_forward.1} parent=1 // pred_region
      %s44 = ssub.s32 512, 512
      %45 = vsyncadd [#allocation6], %s44
      %s46 = sshll.u32 [#allocation7], 4
      %s47 = int_to_ptr.vmem [resolvable:$true] %s46
      %52 = dma.hbm_to_vmem [thread:$0]  %s4, 512, %s47, [#allocation6], 128, 128, 8
    $region21: #{lstm_tagger_forward.1} parent=1 // pred_fallthru
      _
    // Predicated region
    $region22: #{lstm_tagger_forward.1} parent=1 // pred_check
      _
    $region23: #{lstm_tagger_forward.1} parent=1 // pred_check_branch
      %54 = sbr.rel (0) target = $region25
    $region24: #{lstm_tagger_forward.1} parent=1 // pred_region
      %s56 = ssub.s32 16, 16
      %57 = vsyncadd [#allocation9], %s56
      %s59 = sshll.u32 [#allocation8], 4
      %s60 = int_to_ptr.vmem [resolvable:$true] %s59
      %62 = dma.hbm_to_vmem [thread:$0]  %s5, 16, %s60, [#allocation9]
    $region25: #{lstm_tagger_forward.1} parent=1 // pred_fallthru
      _
    // Predicated region
    $region26: #{lstm_tagger_forward.1} parent=1 // pred_check
      _
    $region27: #{lstm_tagger_forward.1} parent=1 // pred_check_branch
      %64 = sbr.rel (0) target = $region29
    $region28: #{lstm_tagger_forward.1} parent=1 // pred_region
      %65 = dma.done [#allocation3], 2048
    $region29: #{lstm_tagger_forward.1} parent=1 // pred_fallthru
      _
    // Predicated region
    $region30: #{lstm_tagger_forward.1} parent=1 // pred_check
      _
    $region31: #{lstm_tagger_forward.1} parent=1 // pred_check_branch
      %67 = sbr.rel (0) target = $region33
    $region32: #{lstm_tagger_forward.1} parent=1 // pred_region
      %68 = dma.done [#allocation6], 16
    $region33: #{lstm_tagger_forward.1} parent=1 // pred_fallthru
      _
    // Predicated region
    $region34: #{lstm_tagger_forward.1} parent=1 // pred_check
      _
    $region35: #{lstm_tagger_forward.1} parent=1 // pred_check_branch
      %70 = sbr.rel (0) target = $region37
    $region36: #{lstm_tagger_forward.1} parent=1 // pred_region
      %71 = dma.done [#allocation6], 512
    $region37: #{lstm_tagger_forward.1} parent=1 // pred_fallthru
      _
    // Predicated region
    $region38: #{lstm_tagger_forward.1} parent=1 // pred_check
      _
    $region39: #{lstm_tagger_forward.1} parent=1 // pred_check_branch
      %73 = sbr.rel (0) target = $region41
    $region40: #{lstm_tagger_forward.1} parent=1 // pred_region
      %74 = dma.done [#allocation9], 16
    $region41: #{lstm_tagger_forward.1} parent=1 // pred_fallthru
      _
    %v75 = vld [vmem:[%s0] sm:$0xff]
    %v76 = vld [vmem:[%s0 + $0x8] sm:$0xff]
    %v77 = vlaneseq
    %v78 = vand.u32 %v77, 127
    %79 = vset.pattern.permute.xlu0 0
    %80 = vperm.xlu0 %79, %v75
    %v81 = vpop.permute.xlu0 %80
    %82 = vset.pattern.permute.xlu0 0
    %83 = vperm.xlu0 %82, %v76
    %v84 = vpop.permute.xlu0 %83
    %vm85 = vcmp.eq.s32.totalorder %v78, %v81
    %vm86 = vcmp.eq.s32.totalorder %v78, %v84
    %v87 = vsel %vm85, 1.0, 0.0
    %v88 = vsel %vm86, 1.0, 0.0
    %v89 = vld [vmem:[#allocation2] sm:$0xff]
    %v90 = vld [vmem:[#allocation2 + $0x8] sm:$0xff]
    %v91 = vld [vmem:[#allocation2 + $0x10] sm:$0xff]
    %v92 = vld [vmem:[#allocation2 + $0x18] sm:$0xff]
    %v93 = vld [vmem:[#allocation2 + $0x20] sm:$0xff]
    %v94 = vld [vmem:[#allocation2 + $0x28] sm:$0xff]
    %v95 = vld [vmem:[#allocation2 + $0x30] sm:$0xff]
    %v96 = vld [vmem:[#allocation2 + $0x38] sm:$0xff]
    %v97 = vld [vmem:[#allocation2 + $0x40] sm:$0xff]
    %v98 = vld [vmem:[#allocation2 + $0x48] sm:$0xff]
    %v99 = vld [vmem:[#allocation2 + $0x50] sm:$0xff]
    %v100 = vld [vmem:[#allocation2 + $0x58] sm:$0xff]
    %v101 = vld [vmem:[#allocation2 + $0x60] sm:$0xff]
    %v102 = vld [vmem:[#allocation2 + $0x68] sm:$0xff]
    %v103 = vld [vmem:[#allocation2 + $0x70] sm:$0xff]
    %v104 = vld [vmem:[#allocation2 + $0x78] sm:$0xff]
    %v105 = vld [vmem:[#allocation5] sm:$0x1]
    %v107 = vlaneseq
    %v108 = vshrl.u32 %v107, 7
    %v109 = vsub.s32 0, %v108
    %v110 = vrot.slane %v105, %v109
    %112 = vmatprep.subr.mxu0 0.0
    %113 = vmatpush1.msra.mxu0 %v89
    %114 = vmatprep.subr.mxu0 0.0
    %115 = vmatpush1.msra.mxu0 %v90
    %116 = vmatprep.subr.mxu0 0.0
    %117 = vmatpush1.msra.mxu0 %v91
    %118 = vmatprep.subr.mxu0 0.0
    %119 = vmatpush1.msra.mxu0 %v92
    %120 = vmatprep.subr.mxu0 0.0
    %121 = vmatpush1.msra.mxu0 %v93
    %122 = vmatprep.subr.mxu0 0.0
    %123 = vmatpush1.msra.mxu0 %v94
    %124 = vmatprep.subr.mxu0 0.0
    %125 = vmatpush1.msra.mxu0 %v95
    %126 = vmatprep.subr.mxu0 0.0
    %127 = vmatpush1.msra.mxu0 %v96
    %128 = vmatprep.subr.mxu0 0.0
    %129 = vmatpush1.msra.mxu0 %v97
    %130 = vmatprep.subr.mxu0 0.0
    %131 = vmatpush1.msra.mxu0 %v98
    %132 = vmatprep.subr.mxu0 0.0
    %133 = vmatpush1.msra.mxu0 %v99
    %134 = vmatprep.subr.mxu0 0.0
    %135 = vmatpush1.msra.mxu0 %v100
    %136 = vmatprep.subr.mxu0 0.0
    %137 = vmatpush1.msra.mxu0 %v101
    %138 = vmatprep.subr.mxu0 0.0
    %139 = vmatpush1.msra.mxu0 %v102
    %140 = vmatprep.subr.mxu0 0.0
    %141 = vmatpush1.msra.mxu0 %v103
    %142 = vmatprep.subr.mxu0 0.0
    %143 = vmatpush1.msra.mxu0 %v104
    %144 = vmatprep.subr.mxu0 0.0
    %145 = vmatpush1.msra.mxu0 0.0
    %146 = vmatprep.subr.mxu0 0.0
    %147 = vmatpush1.msra.mxu0 0.0
    %148 = vmatprep.subr.mxu0 0.0
    %149 = vmatpush1.msra.mxu0 0.0
    %150 = vmatprep.subr.mxu0 0.0
    %151 = vmatpush1.msra.mxu0 0.0
    %152 = vmatprep.subr.mxu0 0.0
    %153 = vmatpush1.msra.mxu0 0.0
    %154 = vmatprep.subr.mxu0 0.0
    %155 = vmatpush1.msra.mxu0 0.0
    %156 = vmatprep.subr.mxu0 0.0
    %157 = vmatpush1.msra.mxu0 0.0
    %158 = vmatprep.subr.mxu0 0.0
    %159 = vmatpush1.msra.mxu0 0.0
    %160 = vmatprep.subr.mxu0 0.0
    %161 = vmatpush1.msra.mxu0 0.0
    %162 = vmatprep.subr.mxu0 0.0
    %163 = vmatpush1.msra.mxu0 0.0
    %164 = vmatprep.subr.mxu0 0.0
    %165 = vmatpush1.msra.mxu0 0.0
    %166 = vmatprep.subr.mxu0 0.0
    %167 = vmatpush1.msra.mxu0 0.0
    %168 = vmatprep.subr.mxu0 0.0
    %169 = vmatpush1.msra.mxu0 0.0
    %170 = vmatprep.subr.mxu0 0.0
    %171 = vmatpush1.msra.mxu0 0.0
    %172 = vmatprep.subr.mxu0 0.0
    %173 = vmatpush1.msra.mxu0 0.0
    %174 = vmatprep.subr.mxu0 0.0
    %175 = vmatpush1.msra.mxu0 0.0
    %176 = vmatprep.mubr.f32.mxu0 0.0
    %177 = vmatmul.mubr.f32.gmra.mrb[0].mxu0 %v87
    %v178 = vpop.f32.mrb[0].mxu0
    %v179 = vadd.f32 %v110, %v178
    %v180 = vpop.f32.mrb[0].mxu0
    %181 = vmatprep.mubr.f32.mxu0 0.0
    %182 = vmatmul.mubr.f32.gmra.mrb[0].mxu0 %v88
    %v183 = vpop.f32.mrb[0].mxu0
    %v184 = vadd.f32 %v110, %v183
    %v185 = vpop.f32.mrb[0].mxu0
    %186 = vdwg.mxu0
    %v187 = vld [vmem:[%s3] sm:$0xff]
    %v188 = vld [vmem:[%s3 + $0x8] sm:$0xff]
    %v189 = vld [vmem:[%s3 + $0x10] sm:$0xff]
    %v190 = vld [vmem:[%s3 + $0x18] sm:$0xff]
    %vm191 = vcmask 261120
    %v193 = vsel %vm191, 0.0, 0
    %195 = vmatprep.subr.mxu0 0.0
    %196 = vmatpush1.msra.mxu0 %v187
    %197 = vmatprep.subr.mxu0 0.0
    %198 = vmatpush1.msra.mxu0 %v188
    %199 = vmatprep.subr.mxu0 0.0
    %200 = vmatpush1.msra.mxu0 %v189
    %201 = vmatprep.subr.mxu0 0.0
    %202 = vmatpush1.msra.mxu0 %v190
    %203 = vmatprep.subr.mxu0 0.0
    %204 = vmatpush1.msra.mxu0 0.0
    %205 = vmatprep.subr.mxu0 0.0
    %206 = vmatpush1.msra.mxu0 0.0
    %207 = vmatprep.subr.mxu0 0.0
    %208 = vmatpush1.msra.mxu0 0.0
    %209 = vmatprep.subr.mxu0 0.0
    %210 = vmatpush1.msra.mxu0 0.0
    %211 = vmatprep.subr.mxu0 0.0
    %212 = vmatpush1.msra.mxu0 0.0
    %213 = vmatprep.subr.mxu0 0.0
    %214 = vmatpush1.msra.mxu0 0.0
    %215 = vmatprep.subr.mxu0 0.0
    %216 = vmatpush1.msra.mxu0 0.0
    %217 = vmatprep.subr.mxu0 0.0
    %218 = vmatpush1.msra.mxu0 0.0
    %219 = vmatprep.subr.mxu0 0.0
    %220 = vmatpush1.msra.mxu0 0.0
    %221 = vmatprep.subr.mxu0 0.0
    %222 = vmatpush1.msra.mxu0 0.0
    %223 = vmatprep.subr.mxu0 0.0
    %224 = vmatpush1.msra.mxu0 0.0
    %225 = vmatprep.subr.mxu0 0.0
    %226 = vmatpush1.msra.mxu0 0.0
    %227 = vmatprep.subr.mxu0 0.0
    %228 = vmatpush1.msra.mxu0 0.0
    %229 = vmatprep.subr.mxu0 0.0
    %230 = vmatpush1.msra.mxu0 0.0
    %231 = vmatprep.subr.mxu0 0.0
    %232 = vmatpush1.msra.mxu0 0.0
    %233 = vmatprep.subr.mxu0 0.0
    %234 = vmatpush1.msra.mxu0 0.0
    %235 = vmatprep.subr.mxu0 0.0
    %236 = vmatpush1.msra.mxu0 0.0
    %237 = vmatprep.subr.mxu0 0.0
    %238 = vmatpush1.msra.mxu0 0.0
    %239 = vmatprep.subr.mxu0 0.0
    %240 = vmatpush1.msra.mxu0 0.0
    %241 = vmatprep.subr.mxu0 0.0
    %242 = vmatpush1.msra.mxu0 0.0
    %243 = vmatprep.subr.mxu0 0.0
    %244 = vmatpush1.msra.mxu0 0.0
    %245 = vmatprep.subr.mxu0 0.0
    %246 = vmatpush1.msra.mxu0 0.0
    %247 = vmatprep.subr.mxu0 0.0
    %248 = vmatpush1.msra.mxu0 0.0
    %249 = vmatprep.subr.mxu0 0.0
    %250 = vmatpush1.msra.mxu0 0.0
    %251 = vmatprep.subr.mxu0 0.0
    %252 = vmatpush1.msra.mxu0 0.0
    %253 = vmatprep.subr.mxu0 0.0
    %254 = vmatpush1.msra.mxu0 0.0
    %255 = vmatprep.subr.mxu0 0.0
    %256 = vmatpush1.msra.mxu0 0.0
    %257 = vmatprep.subr.mxu0 0.0
    %258 = vmatpush1.msra.mxu0 0.0
    %259 = vmatprep.mubr.f32.mxu0 0.0
    %260 = vmatmul.mubr.f32.gmra.mrb[0].mxu0 %v193
    %v261 = vpop.f32.mrb[0].mxu0
    %v262 = vadd.f32 0.0, %v261
    %v263 = vpop.f32.mrb[0].mxu0
    %264 = vdwg.mxu0
    %v266 = vrot.slane %v262, 1
    %v269 = vadd.f32 %v179, %v262
    %v270 = vadd.f32 %v184, %v266
    %v271 = vmul.f32 %v269, 0.5
    %v272 = vmul.f32 %v270, 0.5
    %v273 = vtanh.pop %v271
    %v274 = vtanh.pop %v272
    %v275 = vmul.f32 %v273, 0.5
    %v276 = vmul.f32 %v274, 0.5
    %v277 = vadd.f32 %v275, 0.5
    %v278 = vadd.f32 %v276, 0.5
    %v279 = vtanh.pop %v269
    %v280 = vtanh.pop %v270
    %v281 = vmul.f32 %v277, 0.0
    %v282 = vmul.f32 %v278, 0.0
    %285 = vrot.lane.b32.xlu0 %v279, 64
    %v286 = vpop.permute.xlu0 %285
    %287 = vrot.lane.b32.xlu0 %v280, 64
    %v288 = vpop.permute.xlu0 %287
    %v291 = vmul.f32 %v277, %v286
    %v292 = vmul.f32 %v278, %v288
    %295 = vrot.lane.b32.xlu0 %v291, 32
    %v296 = vpop.permute.xlu0 %295
    %297 = vrot.lane.b32.xlu0 %v292, 32
    %v298 = vpop.permute.xlu0 %297
    %v301 = vadd.f32 %v281, %v296
    %v302 = vadd.f32 %v282, %v298
    %v303 = vtanh.pop %v301
    %v304 = vtanh.pop %v302
    %307 = vrot.lane.b32.xlu0 %v303, 64
    %v308 = vpop.permute.xlu0 %307
    %309 = vrot.lane.b32.xlu0 %v304, 64
    %v310 = vpop.permute.xlu0 %309
    %v313 = vmul.f32 %v277, %v308
    %v314 = vmul.f32 %v278, %v310
    %v317 = vrot.slane %v314, 7
    %vm318 = vcmask 1041409
    %v319 = vsel %vm318, %v317, %v313
    %320 = vrot.lane.b32.xlu0 %v319, 32
    %v321 = vpop.permute.xlu0 %320
    %v322 = vsel %vm191, %v321, 0
    %324 = vmatprep.subr.mxu0 0.0
    %325 = vmatpush1.msra.mxu0 %v187
    %326 = vmatprep.subr.mxu0 0.0
    %327 = vmatpush1.msra.mxu0 %v188
    %328 = vmatprep.subr.mxu0 0.0
    %329 = vmatpush1.msra.mxu0 %v189
    %330 = vmatprep.subr.mxu0 0.0
    %331 = vmatpush1.msra.mxu0 %v190
    %332 = vmatprep.subr.mxu0 0.0
    %333 = vmatpush1.msra.mxu0 0.0
    %334 = vmatprep.subr.mxu0 0.0
    %335 = vmatpush1.msra.mxu0 0.0
    %336 = vmatprep.subr.mxu0 0.0
    %337 = vmatpush1.msra.mxu0 0.0
    %338 = vmatprep.subr.mxu0 0.0
    %339 = vmatpush1.msra.mxu0 0.0
    %340 = vmatprep.subr.mxu0 0.0
    %341 = vmatpush1.msra.mxu0 0.0
    %342 = vmatprep.subr.mxu0 0.0
    %343 = vmatpush1.msra.mxu0 0.0
    %344 = vmatprep.subr.mxu0 0.0
    %345 = vmatpush1.msra.mxu0 0.0
    %346 = vmatprep.subr.mxu0 0.0
    %347 = vmatpush1.msra.mxu0 0.0
    %348 = vmatprep.subr.mxu0 0.0
    %349 = vmatpush1.msra.mxu0 0.0
    %350 = vmatprep.subr.mxu0 0.0
    %351 = vmatpush1.msra.mxu0 0.0
    %352 = vmatprep.subr.mxu0 0.0
    %353 = vmatpush1.msra.mxu0 0.0
    %354 = vmatprep.subr.mxu0 0.0
    %355 = vmatpush1.msra.mxu0 0.0
    %356 = vmatprep.subr.mxu0 0.0
    %357 = vmatpush1.msra.mxu0 0.0
    %358 = vmatprep.subr.mxu0 0.0
    %359 = vmatpush1.msra.mxu0 0.0
    %360 = vmatprep.subr.mxu0 0.0
    %361 = vmatpush1.msra.mxu0 0.0
    %362 = vmatprep.subr.mxu0 0.0
    %363 = vmatpush1.msra.mxu0 0.0
    %364 = vmatprep.subr.mxu0 0.0
    %365 = vmatpush1.msra.mxu0 0.0
    %366 = vmatprep.subr.mxu0 0.0
    %367 = vmatpush1.msra.mxu0 0.0
    %368 = vmatprep.subr.mxu0 0.0
    %369 = vmatpush1.msra.mxu0 0.0
    %370 = vmatprep.subr.mxu0 0.0
    %371 = vmatpush1.msra.mxu0 0.0
    %372 = vmatprep.subr.mxu0 0.0
    %373 = vmatpush1.msra.mxu0 0.0
    %374 = vmatprep.subr.mxu0 0.0
    %375 = vmatpush1.msra.mxu0 0.0
    %376 = vmatprep.subr.mxu0 0.0
    %377 = vmatpush1.msra.mxu0 0.0
    %378 = vmatprep.subr.mxu0 0.0
    %379 = vmatpush1.msra.mxu0 0.0
    %380 = vmatprep.subr.mxu0 0.0
    %381 = vmatpush1.msra.mxu0 0.0
    %382 = vmatprep.subr.mxu0 0.0
    %383 = vmatpush1.msra.mxu0 0.0
    %384 = vmatprep.subr.mxu0 0.0
    %385 = vmatpush1.msra.mxu0 0.0
    %386 = vmatprep.subr.mxu0 0.0
    %387 = vmatpush1.msra.mxu0 0.0
    %388 = vmatprep.mubr.f32.mxu0 0.0
    %389 = vmatmul.mubr.f32.gmra.mrb[0].mxu0 %v322
    %v390 = vpop.f32.mrb[0].mxu0
    %v391 = vadd.f32 0.0, %v390
    %v392 = vpop.f32.mrb[0].mxu0
    %393 = vdwg.mxu0
    %v395 = vrot.slane %v391, 7
    %v398 = vadd.f32 %v179, %v395
    %v399 = vadd.f32 %v184, %v391
    %v400 = vmul.f32 %v398, 0.5
    %v401 = vmul.f32 %v399, 0.5
    %v402 = vtanh.pop %v400
    %v403 = vtanh.pop %v401
    %v404 = vmul.f32 %v402, 0.5
    %v405 = vmul.f32 %v403, 0.5
    %v406 = vadd.f32 %v404, 0.5
    %v407 = vadd.f32 %v405, 0.5
    %v408 = vtanh.pop %v398
    %v409 = vtanh.pop %v399
    %v412 = vrot.slane %v301, 7
    %v413 = vrot.slane %v302, 7
    %v416 = vmul.f32 %v406, %v412
    %v417 = vmul.f32 %v407, %v413
    %420 = vrot.lane.b32.xlu0 %v408, 64
    %v421 = vpop.permute.xlu0 %420
    %422 = vrot.lane.b32.xlu0 %v409, 64
    %v423 = vpop.permute.xlu0 %422
    %v426 = vmul.f32 %v406, %v421
    %v427 = vmul.f32 %v407, %v423
    %430 = vrot.lane.b32.xlu0 %v426, 32
    %v431 = vpop.permute.xlu0 %430
    %432 = vrot.lane.b32.xlu0 %v427, 32
    %v433 = vpop.permute.xlu0 %432
    %v436 = vadd.f32 %v416, %v431
    %v437 = vadd.f32 %v417, %v433
    %v438 = vtanh.pop %v436
    %v439 = vtanh.pop %v437
    %442 = vrot.lane.b32.xlu0 %v438, 64
    %v443 = vpop.permute.xlu0 %442
    %444 = vrot.lane.b32.xlu0 %v439, 64
    %v445 = vpop.permute.xlu0 %444
    %v448 = vmul.f32 %v406, %v443
    %v449 = vmul.f32 %v407, %v445
    %v452 = vrot.slane %v448, 1
    %v453 = vsel %vm318, %v449, %v452
    %454 = vrot.lane.b32.xlu0 %v453, 32
    %v455 = vpop.permute.xlu0 %454
    %v456 = vsel %vm191, %v455, 0
    %458 = vmatprep.subr.mxu0 0.0
    %459 = vmatpush1.msra.mxu0 %v187
    %460 = vmatprep.subr.mxu0 0.0
    %461 = vmatpush1.msra.mxu0 %v188
    %462 = vmatprep.subr.mxu0 0.0
    %463 = vmatpush1.msra.mxu0 %v189
    %464 = vmatprep.subr.mxu0 0.0
    %465 = vmatpush1.msra.mxu0 %v190
    %466 = vmatprep.subr.mxu0 0.0
    %467 = vmatpush1.msra.mxu0 0.0
    %468 = vmatprep.subr.mxu0 0.0
    %469 = vmatpush1.msra.mxu0 0.0
    %470 = vmatprep.subr.mxu0 0.0
    %471 = vmatpush1.msra.mxu0 0.0
    %472 = vmatprep.subr.mxu0 0.0
    %473 = vmatpush1.msra.mxu0 0.0
    %474 = vmatprep.subr.mxu0 0.0
    %475 = vmatpush1.msra.mxu0 0.0
    %476 = vmatprep.subr.mxu0 0.0
    %477 = vmatpush1.msra.mxu0 0.0
    %478 = vmatprep.subr.mxu0 0.0
    %479 = vmatpush1.msra.mxu0 0.0
    %480 = vmatprep.subr.mxu0 0.0
    %481 = vmatpush1.msra.mxu0 0.0
    %482 = vmatprep.subr.mxu0 0.0
    %483 = vmatpush1.msra.mxu0 0.0
    %484 = vmatprep.subr.mxu0 0.0
    %485 = vmatpush1.msra.mxu0 0.0
    %486 = vmatprep.subr.mxu0 0.0
    %487 = vmatpush1.msra.mxu0 0.0
    %488 = vmatprep.subr.mxu0 0.0
    %489 = vmatpush1.msra.mxu0 0.0
    %490 = vmatprep.subr.mxu0 0.0
    %491 = vmatpush1.msra.mxu0 0.0
    %492 = vmatprep.subr.mxu0 0.0
    %493 = vmatpush1.msra.mxu0 0.0
    %494 = vmatprep.subr.mxu0 0.0
    %495 = vmatpush1.msra.mxu0 0.0
    %496 = vmatprep.subr.mxu0 0.0
    %497 = vmatpush1.msra.mxu0 0.0
    %498 = vmatprep.subr.mxu0 0.0
    %499 = vmatpush1.msra.mxu0 0.0
    %500 = vmatprep.subr.mxu0 0.0
    %501 = vmatpush1.msra.mxu0 0.0
    %502 = vmatprep.subr.mxu0 0.0
    %503 = vmatpush1.msra.mxu0 0.0
    %504 = vmatprep.subr.mxu0 0.0
    %505 = vmatpush1.msra.mxu0 0.0
    %506 = vmatprep.subr.mxu0 0.0
    %507 = vmatpush1.msra.mxu0 0.0
    %508 = vmatprep.subr.mxu0 0.0
    %509 = vmatpush1.msra.mxu0 0.0
    %510 = vmatprep.subr.mxu0 0.0
    %511 = vmatpush1.msra.mxu0 0.0
    %512 = vmatprep.subr.mxu0 0.0
    %513 = vmatpush1.msra.mxu0 0.0
    %514 = vmatprep.subr.mxu0 0.0
    %515 = vmatpush1.msra.mxu0 0.0
    %516 = vmatprep.subr.mxu0 0.0
    %517 = vmatpush1.msra.mxu0 0.0
    %518 = vmatprep.subr.mxu0 0.0
    %519 = vmatpush1.msra.mxu0 0.0
    %520 = vmatprep.subr.mxu0 0.0
    %521 = vmatpush1.msra.mxu0 0.0
    %522 = vmatprep.mubr.f32.mxu0 0.0
    %523 = vmatmul.mubr.f32.gmra.mrb[0].mxu0 %v456
    %v524 = vpop.f32.mrb[0].mxu0
    %v525 = vadd.f32 0.0, %v524
    %v526 = vpop.f32.mrb[0].mxu0
    %527 = vdwg.mxu0
    %v529 = vrot.slane %v525, 6
    %v530 = vrot.slane %v525, 7
    %v533 = vadd.f32 %v179, %v529
    %v534 = vadd.f32 %v184, %v530
    %v535 = vmul.f32 %v533, 0.5
    %v536 = vmul.f32 %v534, 0.5
    %v537 = vtanh.pop %v535
    %v538 = vtanh.pop %v536
    %v539 = vmul.f32 %v537, 0.5
    %v540 = vmul.f32 %v538, 0.5
    %v541 = vadd.f32 %v539, 0.5
    %v542 = vadd.f32 %v540, 0.5
    %v543 = vtanh.pop %v533
    %v544 = vtanh.pop %v534
    %v547 = vrot.slane %v436, 7
    %v548 = vrot.slane %v437, 7
    %v551 = vmul.f32 %v541, %v547
    %v552 = vmul.f32 %v542, %v548
    %555 = vrot.lane.b32.xlu0 %v543, 64
    %v556 = vpop.permute.xlu0 %555
    %557 = vrot.lane.b32.xlu0 %v544, 64
    %v558 = vpop.permute.xlu0 %557
    %v561 = vmul.f32 %v541, %v556
    %v562 = vmul.f32 %v542, %v558
    %565 = vrot.lane.b32.xlu0 %v561, 32
    %v566 = vpop.permute.xlu0 %565
    %567 = vrot.lane.b32.xlu0 %v562, 32
    %v568 = vpop.permute.xlu0 %567
    %v571 = vadd.f32 %v551, %v566
    %v572 = vadd.f32 %v552, %v568
    %v573 = vtanh.pop %v571
    %v574 = vtanh.pop %v572
    %577 = vrot.lane.b32.xlu0 %v573, 64
    %v578 = vpop.permute.xlu0 %577
    %579 = vrot.lane.b32.xlu0 %v574, 64
    %v580 = vpop.permute.xlu0 %579
    %v583 = vmul.f32 %v541, %v578
    %v584 = vmul.f32 %v542, %v580
    %v587 = vrot.slane %v583, 2
    %v588 = vrot.slane %v584, 1
    %v589 = vsel %vm318, %v588, %v587
    %590 = vrot.lane.b32.xlu0 %v589, 32
    %v591 = vpop.permute.xlu0 %590
    %v592 = vsel %vm191, %v591, 0
    %594 = vmatprep.subr.mxu0 0.0
    %595 = vmatpush1.msra.mxu0 %v187
    %596 = vmatprep.subr.mxu0 0.0
    %597 = vmatpush1.msra.mxu0 %v188
    %598 = vmatprep.subr.mxu0 0.0
    %599 = vmatpush1.msra.mxu0 %v189
    %600 = vmatprep.subr.mxu0 0.0
    %601 = vmatpush1.msra.mxu0 %v190
    %602 = vmatprep.subr.mxu0 0.0
    %603 = vmatpush1.msra.mxu0 0.0
    %604 = vmatprep.subr.mxu0 0.0
    %605 = vmatpush1.msra.mxu0 0.0
    %606 = vmatprep.subr.mxu0 0.0
    %607 = vmatpush1.msra.mxu0 0.0
    %608 = vmatprep.subr.mxu0 0.0
    %609 = vmatpush1.msra.mxu0 0.0
    %610 = vmatprep.subr.mxu0 0.0
    %611 = vmatpush1.msra.mxu0 0.0
    %612 = vmatprep.subr.mxu0 0.0
    %613 = vmatpush1.msra.mxu0 0.0
    %614 = vmatprep.subr.mxu0 0.0
    %615 = vmatpush1.msra.mxu0 0.0
    %616 = vmatprep.subr.mxu0 0.0
    %617 = vmatpush1.msra.mxu0 0.0
    %618 = vmatprep.subr.mxu0 0.0
    %619 = vmatpush1.msra.mxu0 0.0
    %620 = vmatprep.subr.mxu0 0.0
    %621 = vmatpush1.msra.mxu0 0.0
    %622 = vmatprep.subr.mxu0 0.0
    %623 = vmatpush1.msra.mxu0 0.0
    %624 = vmatprep.subr.mxu0 0.0
    %625 = vmatpush1.msra.mxu0 0.0
    %626 = vmatprep.subr.mxu0 0.0
    %627 = vmatpush1.msra.mxu0 0.0
    %628 = vmatprep.subr.mxu0 0.0
    %629 = vmatpush1.msra.mxu0 0.0
    %630 = vmatprep.subr.mxu0 0.0
    %631 = vmatpush1.msra.mxu0 0.0
    %632 = vmatprep.subr.mxu0 0.0
    %633 = vmatpush1.msra.mxu0 0.0
    %634 = vmatprep.subr.mxu0 0.0
    %635 = vmatpush1.msra.mxu0 0.0
    %636 = vmatprep.subr.mxu0 0.0
    %637 = vmatpush1.msra.mxu0 0.0
    %638 = vmatprep.subr.mxu0 0.0
    %639 = vmatpush1.msra.mxu0 0.0
    %640 = vmatprep.subr.mxu0 0.0
    %641 = vmatpush1.msra.mxu0 0.0
    %642 = vmatprep.subr.mxu0 0.0
    %643 = vmatpush1.msra.mxu0 0.0
    %644 = vmatprep.subr.mxu0 0.0
    %645 = vmatpush1.msra.mxu0 0.0
    %646 = vmatprep.subr.mxu0 0.0
    %647 = vmatpush1.msra.mxu0 0.0
    %648 = vmatprep.subr.mxu0 0.0
    %649 = vmatpush1.msra.mxu0 0.0
    %650 = vmatprep.subr.mxu0 0.0
    %651 = vmatpush1.msra.mxu0 0.0
    %652 = vmatprep.subr.mxu0 0.0
    %653 = vmatpush1.msra.mxu0 0.0
    %654 = vmatprep.subr.mxu0 0.0
    %655 = vmatpush1.msra.mxu0 0.0
    %656 = vmatprep.subr.mxu0 0.0
    %657 = vmatpush1.msra.mxu0 0.0
    %658 = vmatprep.mubr.f32.mxu0 0.0
    %659 = vmatmul.mubr.f32.gmra.mrb[0].mxu0 %v592
    %v660 = vpop.f32.mrb[0].mxu0
    %v661 = vadd.f32 0.0, %v660
    %v662 = vpop.f32.mrb[0].mxu0
    %663 = vdwg.mxu0
    %v665 = vrot.slane %v661, 5
    %v666 = vrot.slane %v661, 6
    %v669 = vadd.f32 %v179, %v665
    %v670 = vadd.f32 %v184, %v666
    %v671 = vmul.f32 %v669, 0.5
    %v672 = vmul.f32 %v670, 0.5
    %v673 = vtanh.pop %v671
    %v674 = vtanh.pop %v672
    %v675 = vmul.f32 %v673, 0.5
    %v676 = vmul.f32 %v674, 0.5
    %v677 = vadd.f32 %v675, 0.5
    %v678 = vadd.f32 %v676, 0.5
    %v679 = vtanh.pop %v669
    %v680 = vtanh.pop %v670
    %v683 = vrot.slane %v571, 7
    %v684 = vrot.slane %v572, 7
    %v687 = vmul.f32 %v677, %v683
    %v688 = vmul.f32 %v678, %v684
    %691 = vrot.lane.b32.xlu0 %v679, 64
    %v692 = vpop.permute.xlu0 %691
    %693 = vrot.lane.b32.xlu0 %v680, 64
    %v694 = vpop.permute.xlu0 %693
    %v697 = vmul.f32 %v677, %v692
    %v698 = vmul.f32 %v678, %v694
    %701 = vrot.lane.b32.xlu0 %v697, 32
    %v702 = vpop.permute.xlu0 %701
    %703 = vrot.lane.b32.xlu0 %v698, 32
    %v704 = vpop.permute.xlu0 %703
    %v707 = vadd.f32 %v687, %v702
    %v708 = vadd.f32 %v688, %v704
    %v709 = vtanh.pop %v707
    %v710 = vtanh.pop %v708
    %713 = vrot.lane.b32.xlu0 %v709, 64
    %v714 = vpop.permute.xlu0 %713
    %715 = vrot.lane.b32.xlu0 %v710, 64
    %v716 = vpop.permute.xlu0 %715
    %v719 = vmul.f32 %v677, %v714
    %v720 = vmul.f32 %v678, %v716
    %v723 = vrot.slane %v719, 3
    %v724 = vrot.slane %v720, 2
    %v725 = vsel %vm318, %v724, %v723
    %726 = vrot.lane.b32.xlu0 %v725, 32
    %v727 = vpop.permute.xlu0 %726
    %v728 = vsel %vm191, %v727, 0
    %730 = vmatprep.subr.mxu0 0.0
    %731 = vmatpush1.msra.mxu0 %v187
    %732 = vmatprep.subr.mxu0 0.0
    %733 = vmatpush1.msra.mxu0 %v188
    %734 = vmatprep.subr.mxu0 0.0
    %735 = vmatpush1.msra.mxu0 %v189
    %736 = vmatprep.subr.mxu0 0.0
    %737 = vmatpush1.msra.mxu0 %v190
    %738 = vmatprep.subr.mxu0 0.0
    %739 = vmatpush1.msra.mxu0 0.0
    %740 = vmatprep.subr.mxu0 0.0
    %741 = vmatpush1.msra.mxu0 0.0
    %742 = vmatprep.subr.mxu0 0.0
    %743 = vmatpush1.msra.mxu0 0.0
    %744 = vmatprep.subr.mxu0 0.0
    %745 = vmatpush1.msra.mxu0 0.0
    %746 = vmatprep.subr.mxu0 0.0
    %747 = vmatpush1.msra.mxu0 0.0
    %748 = vmatprep.subr.mxu0 0.0
    %749 = vmatpush1.msra.mxu0 0.0
    %750 = vmatprep.subr.mxu0 0.0
    %751 = vmatpush1.msra.mxu0 0.0
    %752 = vmatprep.subr.mxu0 0.0
    %753 = vmatpush1.msra.mxu0 0.0
    %754 = vmatprep.subr.mxu0 0.0
    %755 = vmatpush1.msra.mxu0 0.0
    %756 = vmatprep.subr.mxu0 0.0
    %757 = vmatpush1.msra.mxu0 0.0
    %758 = vmatprep.subr.mxu0 0.0
    %759 = vmatpush1.msra.mxu0 0.0
    %760 = vmatprep.subr.mxu0 0.0
    %761 = vmatpush1.msra.mxu0 0.0
    %762 = vmatprep.subr.mxu0 0.0
    %763 = vmatpush1.msra.mxu0 0.0
    %764 = vmatprep.subr.mxu0 0.0
    %765 = vmatpush1.msra.mxu0 0.0
    %766 = vmatprep.subr.mxu0 0.0
    %767 = vmatpush1.msra.mxu0 0.0
    %768 = vmatprep.subr.mxu0 0.0
    %769 = vmatpush1.msra.mxu0 0.0
    %770 = vmatprep.subr.mxu0 0.0
    %771 = vmatpush1.msra.mxu0 0.0
    %772 = vmatprep.subr.mxu0 0.0
    %773 = vmatpush1.msra.mxu0 0.0
    %774 = vmatprep.subr.mxu0 0.0
    %775 = vmatpush1.msra.mxu0 0.0
    %776 = vmatprep.subr.mxu0 0.0
    %777 = vmatpush1.msra.mxu0 0.0
    %778 = vmatprep.subr.mxu0 0.0
    %779 = vmatpush1.msra.mxu0 0.0
    %780 = vmatprep.subr.mxu0 0.0
    %781 = vmatpush1.msra.mxu0 0.0
    %782 = vmatprep.subr.mxu0 0.0
    %783 = vmatpush1.msra.mxu0 0.0
    %784 = vmatprep.subr.mxu0 0.0
    %785 = vmatpush1.msra.mxu0 0.0
    %786 = vmatprep.subr.mxu0 0.0
    %787 = vmatpush1.msra.mxu0 0.0
    %788 = vmatprep.subr.mxu0 0.0
    %789 = vmatpush1.msra.mxu0 0.0
    %790 = vmatprep.subr.mxu0 0.0
    %791 = vmatpush1.msra.mxu0 0.0
    %792 = vmatprep.subr.mxu0 0.0
    %793 = vmatpush1.msra.mxu0 0.0
    %794 = vmatprep.mubr.f32.mxu0 0.0
    %795 = vmatmul.mubr.f32.gmra.mrb[0].mxu0 %v728
    %v796 = vpop.f32.mrb[0].mxu0
    %v797 = vadd.f32 0.0, %v796
    %v798 = vpop.f32.mrb[0].mxu0
    %799 = vdwg.mxu0
    %v801 = vrot.slane %v797, 4
    %v802 = vrot.slane %v797, 5
    %v805 = vadd.f32 %v179, %v801
    %v806 = vadd.f32 %v184, %v802
    %v807 = vmul.f32 %v805, 0.5
    %v808 = vmul.f32 %v806, 0.5
    %v809 = vtanh.pop %v807
    %v810 = vtanh.pop %v808
    %v811 = vmul.f32 %v809, 0.5
    %v812 = vmul.f32 %v810, 0.5
    %v813 = vadd.f32 %v811, 0.5
    %v814 = vadd.f32 %v812, 0.5
    %v815 = vtanh.pop %v805
    %v816 = vtanh.pop %v806
    %v819 = vrot.slane %v707, 7
    %v820 = vrot.slane %v708, 7
    %v823 = vmul.f32 %v813, %v819
    %v824 = vmul.f32 %v814, %v820
    %827 = vrot.lane.b32.xlu0 %v815, 64
    %v828 = vpop.permute.xlu0 %827
    %829 = vrot.lane.b32.xlu0 %v816, 64
    %v830 = vpop.permute.xlu0 %829
    %v833 = vmul.f32 %v813, %v828
    %v834 = vmul.f32 %v814, %v830
    %837 = vrot.lane.b32.xlu0 %v833, 32
    %v838 = vpop.permute.xlu0 %837
    %839 = vrot.lane.b32.xlu0 %v834, 32
    %v840 = vpop.permute.xlu0 %839
    %v843 = vadd.f32 %v823, %v838
    %v844 = vadd.f32 %v824, %v840
    %v845 = vtanh.pop %v843
    %v846 = vtanh.pop %v844
    %849 = vrot.lane.b32.xlu0 %v845, 64
    %v850 = vpop.permute.xlu0 %849
    %851 = vrot.lane.b32.xlu0 %v846, 64
    %v852 = vpop.permute.xlu0 %851
    %v855 = vmul.f32 %v813, %v850
    %v856 = vmul.f32 %v814, %v852
    %v859 = vrot.slane %v855, 4
    %v860 = vrot.slane %v856, 3
    %v861 = vsel %vm318, %v860, %v859
    %862 = vrot.lane.b32.xlu0 %v861, 32
    %v863 = vpop.permute.xlu0 %862
    %v864 = vsel %vm191, %v863, 0
    %866 = vmatprep.subr.mxu0 0.0
    %867 = vmatpush1.msra.mxu0 %v187
    %868 = vmatprep.subr.mxu0 0.0
    %869 = vmatpush1.msra.mxu0 %v188
    %870 = vmatprep.subr.mxu0 0.0
    %871 = vmatpush1.msra.mxu0 %v189
    %872 = vmatprep.subr.mxu0 0.0
    %873 = vmatpush1.msra.mxu0 %v190
    %874 = vmatprep.subr.mxu0 0.0
    %875 = vmatpush1.msra.mxu0 0.0
    %876 = vmatprep.subr.mxu0 0.0
    %877 = vmatpush1.msra.mxu0 0.0
    %878 = vmatprep.subr.mxu0 0.0
    %879 = vmatpush1.msra.mxu0 0.0
    %880 = vmatprep.subr.mxu0 0.0
    %881 = vmatpush1.msra.mxu0 0.0
    %882 = vmatprep.subr.mxu0 0.0
    %883 = vmatpush1.msra.mxu0 0.0
    %884 = vmatprep.subr.mxu0 0.0
    %885 = vmatpush1.msra.mxu0 0.0
    %886 = vmatprep.subr.mxu0 0.0
    %887 = vmatpush1.msra.mxu0 0.0
    %888 = vmatprep.subr.mxu0 0.0
    %889 = vmatpush1.msra.mxu0 0.0
    %890 = vmatprep.subr.mxu0 0.0
    %891 = vmatpush1.msra.mxu0 0.0
    %892 = vmatprep.subr.mxu0 0.0
    %893 = vmatpush1.msra.mxu0 0.0
    %894 = vmatprep.subr.mxu0 0.0
    %895 = vmatpush1.msra.mxu0 0.0
    %896 = vmatprep.subr.mxu0 0.0
    %897 = vmatpush1.msra.mxu0 0.0
    %898 = vmatprep.subr.mxu0 0.0
    %899 = vmatpush1.msra.mxu0 0.0
    %900 = vmatprep.subr.mxu0 0.0
    %901 = vmatpush1.msra.mxu0 0.0
    %902 = vmatprep.subr.mxu0 0.0
    %903 = vmatpush1.msra.mxu0 0.0
    %904 = vmatprep.subr.mxu0 0.0
    %905 = vmatpush1.msra.mxu0 0.0
    %906 = vmatprep.subr.mxu0 0.0
    %907 = vmatpush1.msra.mxu0 0.0
    %908 = vmatprep.subr.mxu0 0.0
    %909 = vmatpush1.msra.mxu0 0.0
    %910 = vmatprep.subr.mxu0 0.0
    %911 = vmatpush1.msra.mxu0 0.0
    %912 = vmatprep.subr.mxu0 0.0
    %913 = vmatpush1.msra.mxu0 0.0
    %914 = vmatprep.subr.mxu0 0.0
    %915 = vmatpush1.msra.mxu0 0.0
    %916 = vmatprep.subr.mxu0 0.0
    %917 = vmatpush1.msra.mxu0 0.0
    %918 = vmatprep.subr.mxu0 0.0
    %919 = vmatpush1.msra.mxu0 0.0
    %920 = vmatprep.subr.mxu0 0.0
    %921 = vmatpush1.msra.mxu0 0.0
    %922 = vmatprep.subr.mxu0 0.0
    %923 = vmatpush1.msra.mxu0 0.0
    %924 = vmatprep.subr.mxu0 0.0
    %925 = vmatpush1.msra.mxu0 0.0
    %926 = vmatprep.subr.mxu0 0.0
    %927 = vmatpush1.msra.mxu0 0.0
    %928 = vmatprep.subr.mxu0 0.0
    %929 = vmatpush1.msra.mxu0 0.0
    %930 = vmatprep.mubr.f32.mxu0 0.0
    %931 = vmatmul.mubr.f32.gmra.mrb[0].mxu0 %v864
    %v932 = vpop.f32.mrb[0].mxu0
    %v933 = vadd.f32 0.0, %v932
    %v934 = vpop.f32.mrb[0].mxu0
    %935 = vdwg.mxu0
    %v937 = vrot.slane %v933, 3
    %v938 = vrot.slane %v933, 4
    %v941 = vadd.f32 %v179, %v937
    %v942 = vadd.f32 %v184, %v938
    %v943 = vmul.f32 %v941, 0.5
    %v944 = vmul.f32 %v942, 0.5
    %v945 = vtanh.pop %v943
    %v946 = vtanh.pop %v944
    %v947 = vmul.f32 %v945, 0.5
    %v948 = vmul.f32 %v946, 0.5
    %v949 = vadd.f32 %v947, 0.5
    %v950 = vadd.f32 %v948, 0.5
    %v951 = vtanh.pop %v941
    %v952 = vtanh.pop %v942
    %v955 = vrot.slane %v843, 7
    %v956 = vrot.slane %v844, 7
    %v959 = vmul.f32 %v949, %v955
    %v960 = vmul.f32 %v950, %v956
    %963 = vrot.lane.b32.xlu0 %v951, 64
    %v964 = vpop.permute.xlu0 %963
    %965 = vrot.lane.b32.xlu0 %v952, 64
    %v966 = vpop.permute.xlu0 %965
    %v969 = vmul.f32 %v949, %v964
    %v970 = vmul.f32 %v950, %v966
    %973 = vrot.lane.b32.xlu0 %v969, 32
    %v974 = vpop.permute.xlu0 %973
    %975 = vrot.lane.b32.xlu0 %v970, 32
    %v976 = vpop.permute.xlu0 %975
    %v979 = vadd.f32 %v959, %v974
    %v980 = vadd.f32 %v960, %v976
    %v981 = vtanh.pop %v979
    %v982 = vtanh.pop %v980
    %985 = vrot.lane.b32.xlu0 %v981, 64
    %v986 = vpop.permute.xlu0 %985
    %987 = vrot.lane.b32.xlu0 %v982, 64
    %v988 = vpop.permute.xlu0 %987
    %v991 = vmul.f32 %v949, %v986
    %v992 = vmul.f32 %v950, %v988
    %v995 = vrot.slane %v991, 5
    %v996 = vrot.slane %v992, 4
    %v997 = vsel %vm318, %v996, %v995
    %998 = vrot.lane.b32.xlu0 %v997, 32
    %v999 = vpop.permute.xlu0 %998
    %v1000 = vsel %vm191, %v999, 0
    %1002 = vmatprep.subr.mxu0 0.0
    %1003 = vmatpush1.msra.mxu0 %v187
    %1004 = vmatprep.subr.mxu0 0.0
    %1005 = vmatpush1.msra.mxu0 %v188
    %1006 = vmatprep.subr.mxu0 0.0
    %1007 = vmatpush1.msra.mxu0 %v189
    %1008 = vmatprep.subr.mxu0 0.0
    %1009 = vmatpush1.msra.mxu0 %v190
    %1010 = vmatprep.subr.mxu0 0.0
    %1011 = vmatpush1.msra.mxu0 0.0
    %1012 = vmatprep.subr.mxu0 0.0
    %1013 = vmatpush1.msra.mxu0 0.0
    %1014 = vmatprep.subr.mxu0 0.0
    %1015 = vmatpush1.msra.mxu0 0.0
    %1016 = vmatprep.subr.mxu0 0.0
    %1017 = vmatpush1.msra.mxu0 0.0
    %1018 = vmatprep.subr.mxu0 0.0
    %1019 = vmatpush1.msra.mxu0 0.0
    %1020 = vmatprep.subr.mxu0 0.0
    %1021 = vmatpush1.msra.mxu0 0.0
    %1022 = vmatprep.subr.mxu0 0.0
    %1023 = vmatpush1.msra.mxu0 0.0
    %1024 = vmatprep.subr.mxu0 0.0
    %1025 = vmatpush1.msra.mxu0 0.0
    %1026 = vmatprep.subr.mxu0 0.0
    %1027 = vmatpush1.msra.mxu0 0.0
    %1028 = vmatprep.subr.mxu0 0.0
    %1029 = vmatpush1.msra.mxu0 0.0
    %1030 = vmatprep.subr.mxu0 0.0
    %1031 = vmatpush1.msra.mxu0 0.0
    %1032 = vmatprep.subr.mxu0 0.0
    %1033 = vmatpush1.msra.mxu0 0.0
    %1034 = vmatprep.subr.mxu0 0.0
    %1035 = vmatpush1.msra.mxu0 0.0
    %1036 = vmatprep.subr.mxu0 0.0
    %1037 = vmatpush1.msra.mxu0 0.0
    %1038 = vmatprep.subr.mxu0 0.0
    %1039 = vmatpush1.msra.mxu0 0.0
    %1040 = vmatprep.subr.mxu0 0.0
    %1041 = vmatpush1.msra.mxu0 0.0
    %1042 = vmatprep.subr.mxu0 0.0
    %1043 = vmatpush1.msra.mxu0 0.0
    %1044 = vmatprep.subr.mxu0 0.0
    %1045 = vmatpush1.msra.mxu0 0.0
    %1046 = vmatprep.subr.mxu0 0.0
    %1047 = vmatpush1.msra.mxu0 0.0
    %1048 = vmatprep.subr.mxu0 0.0
    %1049 = vmatpush1.msra.mxu0 0.0
    %1050 = vmatprep.subr.mxu0 0.0
    %1051 = vmatpush1.msra.mxu0 0.0
    %1052 = vmatprep.subr.mxu0 0.0
    %1053 = vmatpush1.msra.mxu0 0.0
    %1054 = vmatprep.subr.mxu0 0.0
    %1055 = vmatpush1.msra.mxu0 0.0
    %1056 = vmatprep.subr.mxu0 0.0
    %1057 = vmatpush1.msra.mxu0 0.0
    %1058 = vmatprep.subr.mxu0 0.0
    %1059 = vmatpush1.msra.mxu0 0.0
    %1060 = vmatprep.subr.mxu0 0.0
    %1061 = vmatpush1.msra.mxu0 0.0
    %1062 = vmatprep.subr.mxu0 0.0
    %1063 = vmatpush1.msra.mxu0 0.0
    %1064 = vmatprep.subr.mxu0 0.0
    %1065 = vmatpush1.msra.mxu0 0.0
    %1066 = vmatprep.mubr.f32.mxu0 0.0
    %1067 = vmatmul.mubr.f32.gmra.mrb[0].mxu0 %v1000
    %v1068 = vpop.f32.mrb[0].mxu0
    %v1069 = vadd.f32 0.0, %v1068
    %v1070 = vpop.f32.mrb[0].mxu0
    %1071 = vdwg.mxu0
    %v1073 = vrot.slane %v1069, 2
    %v1074 = vrot.slane %v1069, 3
    %v1077 = vadd.f32 %v179, %v1073
    %v1078 = vadd.f32 %v184, %v1074
    %v1079 = vmul.f32 %v1077, 0.5
    %v1080 = vmul.f32 %v1078, 0.5
    %v1081 = vtanh.pop %v1079
    %v1082 = vtanh.pop %v1080
    %v1083 = vmul.f32 %v1081, 0.5
    %v1084 = vmul.f32 %v1082, 0.5
    %v1085 = vadd.f32 %v1083, 0.5
    %v1086 = vadd.f32 %v1084, 0.5
    %v1087 = vtanh.pop %v1077
    %v1088 = vtanh.pop %v1078
    %v1091 = vrot.slane %v979, 7
    %v1092 = vrot.slane %v980, 7
    %v1095 = vmul.f32 %v1085, %v1091
    %v1096 = vmul.f32 %v1086, %v1092
    %1099 = vrot.lane.b32.xlu0 %v1087, 64
    %v1100 = vpop.permute.xlu0 %1099
    %1101 = vrot.lane.b32.xlu0 %v1088, 64
    %v1102 = vpop.permute.xlu0 %1101
    %v1105 = vmul.f32 %v1085, %v1100
    %v1106 = vmul.f32 %v1086, %v1102
    %1109 = vrot.lane.b32.xlu0 %v1105, 32
    %v1110 = vpop.permute.xlu0 %1109
    %1111 = vrot.lane.b32.xlu0 %v1106, 32
    %v1112 = vpop.permute.xlu0 %1111
    %v1115 = vadd.f32 %v1095, %v1110
    %v1116 = vadd.f32 %v1096, %v1112
    %v1117 = vtanh.pop %v1115
    %v1118 = vtanh.pop %v1116
    %1121 = vrot.lane.b32.xlu0 %v1117, 64
    %v1122 = vpop.permute.xlu0 %1121
    %1123 = vrot.lane.b32.xlu0 %v1118, 64
    %v1124 = vpop.permute.xlu0 %1123
    %v1127 = vmul.f32 %v1085, %v1122
    %v1128 = vmul.f32 %v1086, %v1124
    %v1131 = vrot.slane %v1127, 6
    %v1132 = vrot.slane %v1128, 5
    %v1133 = vsel %vm318, %v1132, %v1131
    %1134 = vrot.lane.b32.xlu0 %v1133, 32
    %v1135 = vpop.permute.xlu0 %1134
    %v1136 = vsel %vm191, %v1135, 0
    %1138 = vmatprep.subr.mxu0 0.0
    %1139 = vmatpush1.msra.mxu0 %v187
    %1140 = vmatprep.subr.mxu0 0.0
    %1141 = vmatpush1.msra.mxu0 %v188
    %1142 = vmatprep.subr.mxu0 0.0
    %1143 = vmatpush1.msra.mxu0 %v189
    %1144 = vmatprep.subr.mxu0 0.0
    %1145 = vmatpush1.msra.mxu0 %v190
    %1146 = vmatprep.subr.mxu0 0.0
    %1147 = vmatpush1.msra.mxu0 0.0
    %1148 = vmatprep.subr.mxu0 0.0
    %1149 = vmatpush1.msra.mxu0 0.0
    %1150 = vmatprep.subr.mxu0 0.0
    %1151 = vmatpush1.msra.mxu0 0.0
    %1152 = vmatprep.subr.mxu0 0.0
    %1153 = vmatpush1.msra.mxu0 0.0
    %1154 = vmatprep.subr.mxu0 0.0
    %1155 = vmatpush1.msra.mxu0 0.0
    %1156 = vmatprep.subr.mxu0 0.0
    %1157 = vmatpush1.msra.mxu0 0.0
    %1158 = vmatprep.subr.mxu0 0.0
    %1159 = vmatpush1.msra.mxu0 0.0
    %1160 = vmatprep.subr.mxu0 0.0
    %1161 = vmatpush1.msra.mxu0 0.0
    %1162 = vmatprep.subr.mxu0 0.0
    %1163 = vmatpush1.msra.mxu0 0.0
    %1164 = vmatprep.subr.mxu0 0.0
    %1165 = vmatpush1.msra.mxu0 0.0
    %1166 = vmatprep.subr.mxu0 0.0
    %1167 = vmatpush1.msra.mxu0 0.0
    %1168 = vmatprep.subr.mxu0 0.0
    %1169 = vmatpush1.msra.mxu0 0.0
    %1170 = vmatprep.subr.mxu0 0.0
    %1171 = vmatpush1.msra.mxu0 0.0
    %1172 = vmatprep.subr.mxu0 0.0
    %1173 = vmatpush1.msra.mxu0 0.0
    %1174 = vmatprep.subr.mxu0 0.0
    %1175 = vmatpush1.msra.mxu0 0.0
    %1176 = vmatprep.subr.mxu0 0.0
    %1177 = vmatpush1.msra.mxu0 0.0
    %1178 = vmatprep.subr.mxu0 0.0
    %1179 = vmatpush1.msra.mxu0 0.0
    %1180 = vmatprep.subr.mxu0 0.0
    %1181 = vmatpush1.msra.mxu0 0.0
    %1182 = vmatprep.subr.mxu0 0.0
    %1183 = vmatpush1.msra.mxu0 0.0
    %1184 = vmatprep.subr.mxu0 0.0
    %1185 = vmatpush1.msra.mxu0 0.0
    %1186 = vmatprep.subr.mxu0 0.0
    %1187 = vmatpush1.msra.mxu0 0.0
    %1188 = vmatprep.subr.mxu0 0.0
    %1189 = vmatpush1.msra.mxu0 0.0
    %1190 = vmatprep.subr.mxu0 0.0
    %1191 = vmatpush1.msra.mxu0 0.0
    %1192 = vmatprep.subr.mxu0 0.0
    %1193 = vmatpush1.msra.mxu0 0.0
    %1194 = vmatprep.subr.mxu0 0.0
    %1195 = vmatpush1.msra.mxu0 0.0
    %1196 = vmatprep.subr.mxu0 0.0
    %1197 = vmatpush1.msra.mxu0 0.0
    %1198 = vmatprep.subr.mxu0 0.0
    %1199 = vmatpush1.msra.mxu0 0.0
    %1200 = vmatprep.subr.mxu0 0.0
    %1201 = vmatpush1.msra.mxu0 0.0
    %1202 = vmatprep.mubr.f32.mxu0 0.0
    %1203 = vmatmul.mubr.f32.gmra.mrb[0].mxu0 %v1136
    %v1204 = vpop.f32.mrb[0].mxu0
    %v1205 = vadd.f32 0.0, %v1204
    %v1206 = vpop.f32.mrb[0].mxu0
    %1207 = vdwg.mxu0
    %v1209 = vrot.slane %v1205, 1
    %v1210 = vrot.slane %v1205, 2
    %v1213 = vadd.f32 %v179, %v1209
    %v1214 = vadd.f32 %v184, %v1210
    %v1215 = vmul.f32 %v1213, 0.5
    %v1216 = vmul.f32 %v1214, 0.5
    %v1217 = vtanh.pop %v1215
    %v1218 = vtanh.pop %v1216
    %v1219 = vmul.f32 %v1217, 0.5
    %v1220 = vmul.f32 %v1218, 0.5
    %v1221 = vadd.f32 %v1219, 0.5
    %v1222 = vadd.f32 %v1220, 0.5
    %v1223 = vtanh.pop %v1213
    %v1224 = vtanh.pop %v1214
    %v1227 = vrot.slane %v1115, 7
    %v1228 = vrot.slane %v1116, 7
    %v1231 = vmul.f32 %v1221, %v1227
    %v1232 = vmul.f32 %v1222, %v1228
    %1235 = vrot.lane.b32.xlu0 %v1223, 64
    %v1236 = vpop.permute.xlu0 %1235
    %1237 = vrot.lane.b32.xlu0 %v1224, 64
    %v1238 = vpop.permute.xlu0 %1237
    %v1241 = vmul.f32 %v1221, %v1236
    %v1242 = vmul.f32 %v1222, %v1238
    %1245 = vrot.lane.b32.xlu0 %v1241, 32
    %v1246 = vpop.permute.xlu0 %1245
    %1247 = vrot.lane.b32.xlu0 %v1242, 32
    %v1248 = vpop.permute.xlu0 %1247
    %v1251 = vadd.f32 %v1231, %v1246
    %v1252 = vadd.f32 %v1232, %v1248
    %v1253 = vtanh.pop %v1251
    %v1254 = vtanh.pop %v1252
    %1257 = vrot.lane.b32.xlu0 %v1253, 64
    %v1258 = vpop.permute.xlu0 %1257
    %1259 = vrot.lane.b32.xlu0 %v1254, 64
    %v1260 = vpop.permute.xlu0 %1259
    %v1263 = vmul.f32 %v1221, %v1258
    %v1264 = vmul.f32 %v1222, %v1260
    %vm1265 = vcmask 1040384
    %v1266 = vsel %vm1265, %v313, %v448
    %v1267 = vsel %vm1265, %v314, %v449
    %vm1268 = vcmask 1041408
    %v1269 = vsel %vm1268, %v1266, %v583
    %v1270 = vsel %vm1268, %v1267, %v584
    %vm1271 = vcmask 1042432
    %v1272 = vsel %vm1271, %v1269, %v719
    %v1273 = vsel %vm1271, %v1270, %v720
    %vm1274 = vcmask 1043456
    %v1275 = vsel %vm1274, %v1272, %v855
    %v1276 = vsel %vm1274, %v1273, %v856
    %vm1277 = vcmask 1044480
    %v1278 = vsel %vm1277, %v1275, %v991
    %v1279 = vsel %vm1277, %v1276, %v992
    %vm1280 = vcmask 1045504
    %v1281 = vsel %vm1280, %v1278, %v1127
    %v1282 = vsel %vm1280, %v1279, %v1128
    %vm1283 = vcmask 1046528
    %v1284 = vsel %vm1283, %v1281, %v1263
    %v1285 = vsel %vm1283, %v1282, %v1264
    %v1286 = vld [vmem:[#allocation7] sm:$0xff]
    %v1287 = vld [vmem:[#allocation7 + $0x8] sm:$0xff]
    %v1288 = vld [vmem:[#allocation7 + $0x10] sm:$0xff]
    %v1289 = vld [vmem:[#allocation7 + $0x18] sm:$0xff]
    %v1290 = vld [vmem:[#allocation8] sm:$0x1]
    %v1292 = vlaneseq
    %v1293 = vshrl.u32 %v1292, 7
    %v1294 = vsub.s32 0, %v1293
    %v1295 = vrot.slane %v1290, %v1294
    %1299 = vrot.lane.b32.xlu0 %v1284, 32
    %v1300 = vpop.permute.xlu0 %1299
    %1301 = vrot.lane.b32.xlu0 %v1285, 32
    %v1302 = vpop.permute.xlu0 %1301
    %v1303 = vsel %vm191, %v1300, 0
    %v1305 = vsel %vm191, %v1302, 0
    %1307 = vmatprep.subr.mxu0 0.0
    %1308 = vmatpush1.msra.mxu0 %v1286
    %1309 = vmatprep.subr.mxu0 0.0
    %1310 = vmatpush1.msra.mxu0 %v1287
    %1311 = vmatprep.subr.mxu0 0.0
    %1312 = vmatpush1.msra.mxu0 %v1288
    %1313 = vmatprep.subr.mxu0 0.0
    %1314 = vmatpush1.msra.mxu0 %v1289
    %1315 = vmatprep.subr.mxu0 0.0
    %1316 = vmatpush1.msra.mxu0 0.0
    %1317 = vmatprep.subr.mxu0 0.0
    %1318 = vmatpush1.msra.mxu0 0.0
    %1319 = vmatprep.subr.mxu0 0.0
    %1320 = vmatpush1.msra.mxu0 0.0
    %1321 = vmatprep.subr.mxu0 0.0
    %1322 = vmatpush1.msra.mxu0 0.0
    %1323 = vmatprep.subr.mxu0 0.0
    %1324 = vmatpush1.msra.mxu0 0.0
    %1325 = vmatprep.subr.mxu0 0.0
    %1326 = vmatpush1.msra.mxu0 0.0
    %1327 = vmatprep.subr.mxu0 0.0
    %1328 = vmatpush1.msra.mxu0 0.0
    %1329 = vmatprep.subr.mxu0 0.0
    %1330 = vmatpush1.msra.mxu0 0.0
    %1331 = vmatprep.subr.mxu0 0.0
    %1332 = vmatpush1.msra.mxu0 0.0
    %1333 = vmatprep.subr.mxu0 0.0
    %1334 = vmatpush1.msra.mxu0 0.0
    %1335 = vmatprep.subr.mxu0 0.0
    %1336 = vmatpush1.msra.mxu0 0.0
    %1337 = vmatprep.subr.mxu0 0.0
    %1338 = vmatpush1.msra.mxu0 0.0
    %1339 = vmatprep.subr.mxu0 0.0
    %1340 = vmatpush1.msra.mxu0 0.0
    %1341 = vmatprep.subr.mxu0 0.0
    %1342 = vmatpush1.msra.mxu0 0.0
    %1343 = vmatprep.subr.mxu0 0.0
    %1344 = vmatpush1.msra.mxu0 0.0
    %1345 = vmatprep.subr.mxu0 0.0
    %1346 = vmatpush1.msra.mxu0 0.0
    %1347 = vmatprep.subr.mxu0 0.0
    %1348 = vmatpush1.msra.mxu0 0.0
    %1349 = vmatprep.subr.mxu0 0.0
    %1350 = vmatpush1.msra.mxu0 0.0
    %1351 = vmatprep.subr.mxu0 0.0
    %1352 = vmatpush1.msra.mxu0 0.0
    %1353 = vmatprep.subr.mxu0 0.0
    %1354 = vmatpush1.msra.mxu0 0.0
    %1355 = vmatprep.subr.mxu0 0.0
    %1356 = vmatpush1.msra.mxu0 0.0
    %1357 = vmatprep.subr.mxu0 0.0
    %1358 = vmatpush1.msra.mxu0 0.0
    %1359 = vmatprep.subr.mxu0 0.0
    %1360 = vmatpush1.msra.mxu0 0.0
    %1361 = vmatprep.subr.mxu0 0.0
    %1362 = vmatpush1.msra.mxu0 0.0
    %1363 = vmatprep.subr.mxu0 0.0
    %1364 = vmatpush1.msra.mxu0 0.0
    %1365 = vmatprep.subr.mxu0 0.0
    %1366 = vmatpush1.msra.mxu0 0.0
    %1367 = vmatprep.subr.mxu0 0.0
    %1368 = vmatpush1.msra.mxu0 0.0
    %1369 = vmatprep.subr.mxu0 0.0
    %1370 = vmatpush1.msra.mxu0 0.0
    %1371 = vmatprep.mubr.f32.mxu0 0.0
    %1372 = vmatmul.mubr.f32.gmra.mrb[0].mxu0 %v1303
    %v1373 = vpop.f32.mrb[0].mxu0
    %v1374 = vadd.f32 %v1295, %v1373
    %v1375 = vpop.f32.mrb[0].mxu0
    %1376 = vmatprep.mubr.f32.mxu0 0.0
    %1377 = vmatmul.mubr.f32.gmra.mrb[0].mxu0 %v1305
    %v1378 = vpop.f32.mrb[0].mxu0
    %v1379 = vadd.f32 %v1295, %v1378
    %v1380 = vpop.f32.mrb[0].mxu0
    %1381 = vdwg.mxu0
    %v1382 = vrot.slane %v1374, 4
    %v1383 = vmax.f32 %v1374, %v1382
    %v1384 = vrot.slane %v1383, 2
    %v1385 = vmax.f32 %v1383, %v1384
    %v1386 = vrot.slane %v1385, 1
    %v1387 = vmax.f32 %v1385, %v1386
    %v1388 = vrot.slane %v1379, 4
    %v1389 = vmax.f32 %v1379, %v1388
    %v1390 = vrot.slane %v1389, 2
    %v1391 = vmax.f32 %v1389, %v1390
    %v1392 = vrot.slane %v1391, 1
    %v1393 = vmax.f32 %v1391, %v1392
    %v1394 = vsub.f32 %v1374, %v1387
    %v1395 = vsub.f32 %v1379, %v1393
    %v1396 = vmul.f32 %v1394, 1.442695
    %v1397 = vpow.pop %v1396
    %v1398 = vmul.f32 %v1395, 1.442695
    %v1399 = vpow.pop %v1398
    %v1400 = vrot.slane %v1397, 4
    %v1401 = vadd.f32 %v1397, %v1400
    %v1402 = vrot.slane %v1401, 2
    %v1403 = vadd.f32 %v1401, %v1402
    %v1404 = vrot.slane %v1403, 1
    %v1405 = vadd.f32 %v1403, %v1404
    %v1406 = vrot.slane %v1399, 4
    %v1407 = vadd.f32 %v1399, %v1406
    %v1408 = vrot.slane %v1407, 2
    %v1409 = vadd.f32 %v1407, %v1408
    %v1410 = vrot.slane %v1409, 1
    %v1411 = vadd.f32 %v1409, %v1410
    %v1412 = vlog2.pop %v1405
    %v1413 = vmul.f32 %v1412, 0.6931472
    %v1414 = vlog2.pop %v1411
    %v1415 = vmul.f32 %v1414, 0.6931472
    %v1416 = vadd.f32 %v1413, %v1387
    %v1417 = vadd.f32 %v1415, %v1393
    %v1418 = vsub.f32 %v1374, %v1416
    %v1419 = vsub.f32 %v1379, %v1417
    %1420 = vst [vmem:[#allocation10] sm:$0xff] %v1418
    %1421 = vst [vmem:[#allocation10 + $0x8] sm:$0xff] %v1419
    // Predicated region
    $region42: #{lstm_tagger_forward.1} parent=1 // pred_check
      _
    $region43: #{lstm_tagger_forward.1} parent=1 // pred_check_branch
      %1423 = sbr.rel (0) target = $region45
    $region44: #{lstm_tagger_forward.1} parent=1 // pred_region
      %s1425 = ssub.s32 256, 256
      %1426 = vsyncadd [#allocation4], %s1425
      %s1427 = sshll.u32 [#allocation10], 4
      %s1428 = int_to_ptr.vmem [resolvable:$true] %s1427
      %1433 = dma.vmem_to_hbm [thread:$0]  %s1428, 256, %s6, [#allocation4], 128, 128, 8
    $region45: #{lstm_tagger_forward.1} parent=1 // pred_fallthru
      _
    // Predicated region
    $region46: #{lstm_tagger_forward.1} parent=1 // pred_check
      _
    $region47: #{lstm_tagger_forward.1} parent=1 // pred_check_branch
      %1435 = sbr.rel (0) target = $region49
    $region48: #{lstm_tagger_forward.1} parent=1 // pred_region
      %1436 = dma.done [#allocation4], 256
    $region49: #{lstm_tagger_forward.1} parent=1 // pred_fallthru
      _
    %1437 = vsyncpa [#allocation3], 1
    %1438 = vsyncpa [#allocation6], 1
    %1439 = vsyncpa [#allocation9], 1
    %1440 = vsyncpa [#allocation4], 1

</llo_original>
